<compile_context>
chip_gen: v7x
topology: tpu7x:2x2x1
jax: 0.10.0
libtpu: 0.0.40
codegen_flags: <defaults>
</compile_context>

<pallas_src>
import functools
import math

import jax
import jax.numpy as jnp
from jax.experimental import pallas as pl
from jax.experimental.pallas import tpu as pltpu


# ----------------------------- configuration --------------------------------
BATCH = 2
SEQ = 8
HIDDEN = 32
NUM_HEADS = 4
HEAD_DIM = HIDDEN // NUM_HEADS
MLP_DIM = 64
LN_EPS = 1e-6

# Packed parameter slab layout (row offsets; lane width padded to SLAB_LANES).
SLAB_LANES = 128                    # >= max(3*HIDDEN, MLP_DIM), lane-aligned
ROW_LN1_W, ROW_LN1_B = 0, 1
ROW_LN2_W, ROW_LN2_B = 2, 3
ROW_BQKV, ROW_BO, ROW_B1, ROW_B2 = 4, 5, 6, 7
ROW_WQKV = 8                        # (HIDDEN, 3*HIDDEN)
ROW_WO = ROW_WQKV + HIDDEN          # (HIDDEN, HIDDEN)
ROW_W1 = ROW_WO + HIDDEN            # (HIDDEN, MLP_DIM)
ROW_W2 = ROW_W1 + HIDDEN            # (MLP_DIM, HIDDEN)
SLAB_ROWS = ROW_W2 + MLP_DIM        # 168 rows (multiple of 8)


# ------------------------------- helpers -------------------------------------
def _layernorm(v, w, b, eps):
    # v: (R, H); w, b: (1, H)  -- torch.nn.LayerNorm semantics (biased variance)
    mu = jnp.mean(v, axis=-1, keepdims=True)
    var = jnp.mean((v - mu) ** 2, axis=-1, keepdims=True)
    return (v - mu) * jax.lax.rsqrt(var + eps) * w + b


def _gelu_exact(v):
    # torch.nn.functional.gelu default (erf-based, approximate='none')
    return 0.5 * v * (1.0 + jax.lax.erf(v * (1.0 / math.sqrt(2.0))))


# ------------------------------- kernel -------------------------------------
def block_kernel(x_ref, p_ref, o_ref, *, batch, seq, hidden, num_heads,
                 head_dim, mlp_dim):
    x = x_ref[...]                                      # (batch*seq, hidden)

    # Static slices of the packed parameter slab (single DMA'd operand).
    ln1w = p_ref[ROW_LN1_W:ROW_LN1_W + 1, :hidden]
    ln1b = p_ref[ROW_LN1_B:ROW_LN1_B + 1, :hidden]
    ln2w = p_ref[ROW_LN2_W:ROW_LN2_W + 1, :hidden]
    ln2b = p_ref[ROW_LN2_B:ROW_LN2_B + 1, :hidden]
    bqkv = p_ref[ROW_BQKV:ROW_BQKV + 1, :3 * hidden]
    bo = p_ref[ROW_BO:ROW_BO + 1, :hidden]
    b1 = p_ref[ROW_B1:ROW_B1 + 1, :mlp_dim]
    b2 = p_ref[ROW_B2:ROW_B2 + 1, :hidden]
    wqkv = p_ref[ROW_WQKV:ROW_WQKV + hidden, :3 * hidden]
    wo = p_ref[ROW_WO:ROW_WO + hidden, :hidden]
    w1 = p_ref[ROW_W1:ROW_W1 + hidden, :mlp_dim]
    w2 = p_ref[ROW_W2:ROW_W2 + mlp_dim, :hidden]

    # ---- attention branch (pre-LN) ----
    xn = _layernorm(x, ln1w, ln1b, LN_EPS)

    # fused QKV projection: one (rows, H) @ (H, 3H) matmul + one bias add.
    # 1/sqrt(head_dim) is already folded into the Q columns of wqkv/bqkv.
    qkv = jnp.dot(xn, wqkv, preferred_element_type=jnp.float32) + bqkv

    ctx_heads = []
    for h in range(num_heads):                          # static, 4 iterations
        lo = h * head_dim
        qh = qkv[:, lo:lo + head_dim].reshape(batch, seq, head_dim)
        kh = qkv[:, hidden + lo:hidden + lo + head_dim].reshape(
            batch, seq, head_dim)
        vh = qkv[:, 2 * hidden + lo:2 * hidden + lo + head_dim].reshape(
            batch, seq, head_dim)

        # batched contractions over the batch dim; last dims contract on the
        # MXU -> no materialized transposes.
        s = jnp.einsum("bqd,bkd->bqk", qh, kh,
                       preferred_element_type=jnp.float32)
        s = s - jnp.max(s, axis=-1, keepdims=True)
        e = jnp.exp(s)
        inv = pl.reciprocal(jnp.sum(e, axis=-1, keepdims=True), approx=False)
        p = e * inv                                     # softmax probs
        # TODO(synk): attention dropout omitted (inference mode identity).
        ctx = jnp.einsum("bqk,bkd->bqd", p, vh,
                         preferred_element_type=jnp.float32)
        ctx_heads.append(ctx.reshape(batch * seq, head_dim))

    # fold heads back on the lane axis (XLU slot), then ONE output projection.
    ctx_all = jnp.concatenate(ctx_heads, axis=-1)       # (batch*seq, hidden)
    attn = jnp.dot(ctx_all, wo, preferred_element_type=jnp.float32) + bo
    # TODO(synk): projection dropout omitted (inference mode identity).
    x1 = x + attn

    # ---- MLP branch (pre-LN) ----
    xn2 = _layernorm(x1, ln2w, ln2b, LN_EPS)
    h1 = _gelu_exact(jnp.dot(xn2, w1, preferred_element_type=jnp.float32) + b1)
    # TODO(synk): MLP dropout omitted (inference mode identity).
    h2 = jnp.dot(h1, w2, preferred_element_type=jnp.float32) + b2

    o_ref[...] = x1 + h2                                # single full-block store


# ------------------------------- wrapper -------------------------------------
def _pack_params(params):
    """Pack all weights/biases into one lane-padded f32 slab (single DMA)."""
    scale = 1.0 / math.sqrt(HEAD_DIM)
    # fold the attention score scale into the Q projection (weight + bias)
    wqkv = jnp.concatenate(
        [params["wq"] * scale, params["wk"], params["wv"]], axis=1)  # (H, 3H)
    bqkv = jnp.concatenate(
        [params["bq"] * scale, params["bk"], params["bv"]], axis=1)  # (1, 3H)

    slab = jnp.zeros((SLAB_ROWS, SLAB_LANES), jnp.float32)

    def put(s, row, arr):
        r, c = arr.shape
        return s.at[row:row + r, 0:c].set(arr)

    slab = put(slab, ROW_LN1_W, params["ln1_w"])
    slab = put(slab, ROW_LN1_B, params["ln1_b"])
    slab = put(slab, ROW_LN2_W, params["ln2_w"])
    slab = put(slab, ROW_LN2_B, params["ln2_b"])
    slab = put(slab, ROW_BQKV, bqkv)
    slab = put(slab, ROW_BO, params["bo"])
    slab = put(slab, ROW_B1, params["b1"])
    slab = put(slab, ROW_B2, params["b2"])
    slab = put(slab, ROW_WQKV, wqkv)
    slab = put(slab, ROW_WO, params["wo"])
    slab = put(slab, ROW_W1, params["w1"])
    slab = put(slab, ROW_W2, params["w2"])
    return slab


def vit_block(x, params):
    """x: (B, S, H) float32; params: dict of weights (see init_params)."""
    B, S, H = x.shape
    rows = B * S
    x2 = x.reshape(rows, H)            # fold batch into rows (lane dim fixed)
    slab = _pack_params(params)        # one packed operand -> one DMA

    kernel = functools.partial(
        block_kernel, batch=B, seq=S, hidden=H,
        num_heads=NUM_HEADS, head_dim=HEAD_DIM, mlp_dim=MLP_DIM)

    flops = (
        2 * rows * H * (3 * H)                          # fused QKV
        + 2 * 2 * B * NUM_HEADS * S * S * HEAD_DIM      # scores + context
        + 2 * rows * H * H                              # output projection
        + 2 * 2 * rows * H * MLP_DIM                    # MLP fc1 + fc2
    )
    transcendentals = (
        B * NUM_HEADS * S * S        # exp
        + B * NUM_HEADS * S          # reciprocal
        + rows * MLP_DIM             # erf
        + 2 * rows                   # rsqrt (two LayerNorms)
    )
    bytes_accessed = 4 * (2 * rows * H + SLAB_ROWS * SLAB_LANES)
    cost = pl.CostEstimate(flops=int(flops),
                           transcendentals=int(transcendentals),
                           bytes_accessed=int(bytes_accessed))

    # Single grid step on all chips: at this size a multi-step / multi-core
    # split only duplicates weight DMAs and per-step overhead.
    out2 = pl.pallas_call(
        kernel,
        out_shape=jax.ShapeDtypeStruct((rows, H), jnp.float32),
        grid=(1,),
        in_specs=[
            pl.BlockSpec((rows, H), lambda i: (0, 0)),
            pl.BlockSpec((SLAB_ROWS, SLAB_LANES), lambda i: (0, 0)),
        ],
        out_specs=pl.BlockSpec((rows, H), lambda i: (0, 0)),
        compiler_params=pltpu.CompilerParams(
            dimension_semantics=("arbitrary",)),
        cost_estimate=cost,
    )(x2, slab)
    return out2.reshape(B, S, H)


# ------------------------- deterministic parameters ---------------------------
def init_params(key):
    ks = jax.random.split(key, 12)
    s = 0.02

    def lin(k, fan_in, fan_out):
        return s * jax.random.normal(k, (fan_in, fan_out), jnp.float32)

    def bias(k, n):
        return s * jax.random.normal(k, (1, n), jnp.float32)

    return {
        "ln1_w": jnp.ones((1, HIDDEN), jnp.float32),
        "ln1_b": jnp.zeros((1, HIDDEN), jnp.float32),
        "wq": lin(ks[0], HIDDEN, HIDDEN), "bq": bias(ks[1], HIDDEN),
        "wk": lin(ks[2], HIDDEN, HIDDEN), "bk": bias(ks[3], HIDDEN),
        "wv": lin(ks[4], HIDDEN, HIDDEN), "bv": bias(ks[5], HIDDEN),
        "wo": lin(ks[6], HIDDEN, HIDDEN), "bo": bias(ks[7], HIDDEN),
        "ln2_w": jnp.ones((1, HIDDEN), jnp.float32),
        "ln2_b": jnp.zeros((1, HIDDEN), jnp.float32),
        "w1": lin(ks[8], HIDDEN, MLP_DIM), "b1": bias(ks[9], MLP_DIM),
        "w2": lin(ks[10], MLP_DIM, HIDDEN), "b2": bias(ks[11], HIDDEN),
    }


# --------------------------- pure-JAX reference -------------------------------
def ref_block(x, p):
    def ln(v, w, b):
        mu = jnp.mean(v, axis=-1, keepdims=True)
        var = jnp.mean((v - mu) ** 2, axis=-1, keepdims=True)
        return (v - mu) * jax.lax.rsqrt(var + LN_EPS) * w + b

    B, S, H = x.shape
    xn = ln(x, p["ln1_w"], p["ln1_b"])
    q = xn @ p["wq"] + p["bq"]
    k = xn @ p["wk"] + p["bk"]
    v = xn @ p["wv"] + p["bv"]
    q = q.reshape(B, S, NUM_HEADS, HEAD_DIM).transpose(0, 2, 1, 3)
    k = k.reshape(B, S, NUM_HEADS, HEAD_DIM).transpose(0, 2, 1, 3)
    v = v.reshape(B, S, NUM_HEADS, HEAD_DIM).transpose(0, 2, 1, 3)
    scores = jnp.einsum("bhqd,bhkd->bhqk", q, k) / math.sqrt(HEAD_DIM)
    probs = jax.nn.softmax(scores, axis=-1)
    ctx = jnp.einsum("bhqk,bhkd->bhqd", probs, v)
    ctx = ctx.transpose(0, 2, 1, 3).reshape(B, S, H)
    attn_out = ctx @ p["wo"] + p["bo"]
    x1 = x + attn_out
    xn2 = ln(x1, p["ln2_w"], p["ln2_b"])
    h1 = jax.nn.gelu(xn2 @ p["w1"] + p["b1"], approximate=False)
    h2 = h1 @ p["w2"] + p["b2"]
    return x1 + h2


# --------------------------------- main ---------------------------------------
if __name__ == "__main__":
    key = jax.random.PRNGKey(0)
    kx, kp = jax.random.split(key)
    x = jax.random.normal(kx, (BATCH, SEQ, HIDDEN), jnp.float32)
    params = init_params(kp)

    out = jax.block_until_ready(vit_block(x, params))
    ref = jax.block_until_ready(ref_block(x, params))

    assert out.shape == (BATCH, SEQ, HIDDEN)
    assert jnp.allclose(out, ref, atol=2e-4, rtol=2e-4), (
        float(jnp.max(jnp.abs(out - ref)))
    )
    print("KERNEL_OK")
</pallas_src>

<mosaic_0001>
module attributes {stable_mosaic.version = 11 : i64} {
  func.func @block_kernel(%arg0: i32, %arg1: memref<16x32xf32, #tpu.memory_space<vmem>>, %arg2: memref<168x128xf32, #tpu.memory_space<vmem>>, %arg3: memref<16x32xf32, #tpu.memory_space<vmem>>) attributes {dimension_semantics = [#tpu.dimension_semantics<arbitrary>], iteration_bounds = array<i64: 1>, scalar_prefetch = 0 : i64, scratch_operands = 0 : i64, tpu.core_type = #tpu.core_type<tc>, window_params = [{pipeline_mode = #tpu.pipeline_mode<synchronous>, transform_indices = @transform_0, window_bounds = array<i64: 16, 32>}, {pipeline_mode = #tpu.pipeline_mode<synchronous>, transform_indices = @transform_1, window_bounds = array<i64: 168, 128>}, {pipeline_mode = #tpu.pipeline_mode<synchronous>, transform_indices = @transform_2, window_bounds = array<i64: 16, 32>}]} {
    %c0 = arith.constant 0 : index
    %c0_0 = arith.constant 0 : index
    %0 = vector.load %arg1[%c0, %c0_0] : memref<16x32xf32, #tpu.memory_space<vmem>>, vector<16x32xf32>
    %c0_1 = arith.constant 0 : index
    %c0_2 = arith.constant 0 : index
    %1 = vector.load %arg2[%c0_1, %c0_2] : memref<168x128xf32, #tpu.memory_space<vmem>>, vector<1x32xf32>
    %c1 = arith.constant 1 : index
    %c0_3 = arith.constant 0 : index
    %2 = vector.load %arg2[%c1, %c0_3] : memref<168x128xf32, #tpu.memory_space<vmem>>, vector<1x32xf32>
    %c2 = arith.constant 2 : index
    %c0_4 = arith.constant 0 : index
    %3 = vector.load %arg2[%c2, %c0_4] : memref<168x128xf32, #tpu.memory_space<vmem>>, vector<1x32xf32>
    %c3 = arith.constant 3 : index
    %c0_5 = arith.constant 0 : index
    %4 = vector.load %arg2[%c3, %c0_5] : memref<168x128xf32, #tpu.memory_space<vmem>>, vector<1x32xf32>
    %c4 = arith.constant 4 : index
    %c0_6 = arith.constant 0 : index
    %5 = vector.load %arg2[%c4, %c0_6] : memref<168x128xf32, #tpu.memory_space<vmem>>, vector<1x96xf32>
    %c5 = arith.constant 5 : index
    %c0_7 = arith.constant 0 : index
    %6 = vector.load %arg2[%c5, %c0_7] : memref<168x128xf32, #tpu.memory_space<vmem>>, vector<1x32xf32>
    %c6 = arith.constant 6 : index
    %c0_8 = arith.constant 0 : index
    %7 = vector.load %arg2[%c6, %c0_8] : memref<168x128xf32, #tpu.memory_space<vmem>>, vector<1x64xf32>
    %c7 = arith.constant 7 : index
    %c0_9 = arith.constant 0 : index
    %8 = vector.load %arg2[%c7, %c0_9] : memref<168x128xf32, #tpu.memory_space<vmem>>, vector<1x32xf32>
    %c8 = arith.constant 8 : index
    %c0_10 = arith.constant 0 : index
    %9 = vector.load %arg2[%c8, %c0_10] : memref<168x128xf32, #tpu.memory_space<vmem>>, vector<32x96xf32>
    %c40 = arith.constant 40 : index
    %c0_11 = arith.constant 0 : index
    %10 = vector.load %arg2[%c40, %c0_11] : memref<168x128xf32, #tpu.memory_space<vmem>>, vector<32x32xf32>
    %c72 = arith.constant 72 : index
    %c0_12 = arith.constant 0 : index
    %11 = vector.load %arg2[%c72, %c0_12] : memref<168x128xf32, #tpu.memory_space<vmem>>, vector<32x64xf32>
    %c104 = arith.constant 104 : index
    %c0_13 = arith.constant 0 : index
    %12 = vector.load %arg2[%c104, %c0_13] : memref<168x128xf32, #tpu.memory_space<vmem>>, vector<64x32xf32>
    %cst = arith.constant dense<0.000000e+00> : vector<16xf32>
    %13 = vector.multi_reduction <add>, %0, %cst [1] : vector<16x32xf32> to vector<16xf32>
    %14 = vector.shape_cast %13 : vector<16xf32> to vector<16x1xf32>
    %cst_14 = arith.constant 3.200000e+01 : f32
    %15 = vector.broadcast %cst_14 : f32 to vector<16x1xf32>
    %16 = arith.divf %14, %15 : vector<16x1xf32>
    %17 = vector.broadcast %16 : vector<16x1xf32> to vector<16x32xf32>
    %18 = arith.subf %0, %17 : vector<16x32xf32>
    %19 = arith.mulf %18, %18 : vector<16x32xf32>
    %cst_15 = arith.constant dense<0.000000e+00> : vector<16xf32>
    %20 = vector.multi_reduction <add>, %19, %cst_15 [1] : vector<16x32xf32> to vector<16xf32>
    %21 = vector.shape_cast %20 : vector<16xf32> to vector<16x1xf32>
    %cst_16 = arith.constant 3.200000e+01 : f32
    %22 = vector.broadcast %cst_16 : f32 to vector<16x1xf32>
    %23 = arith.divf %21, %22 : vector<16x1xf32>
    %24 = vector.broadcast %16 : vector<16x1xf32> to vector<16x32xf32>
    %25 = arith.subf %0, %24 : vector<16x32xf32>
    %cst_17 = arith.constant 9.99999997E-7 : f32
    %26 = vector.broadcast %cst_17 : f32 to vector<16x1xf32>
    %27 = arith.addf %23, %26 : vector<16x1xf32>
    %28 = math.rsqrt %27 : vector<16x1xf32>
    %29 = vector.broadcast %28 : vector<16x1xf32> to vector<16x32xf32>
    %30 = arith.mulf %25, %29 : vector<16x32xf32>
    %31 = vector.broadcast %1 : vector<1x32xf32> to vector<16x32xf32>
    %32 = arith.mulf %30, %31 : vector<16x32xf32>
    %33 = vector.broadcast %2 : vector<1x32xf32> to vector<16x32xf32>
    %34 = arith.addf %32, %33 : vector<16x32xf32>
    %cst_18 = arith.constant dense<0.000000e+00> : vector<16x96xf32>
    %35 = tpu.matmul %34, %9, %cst_18 {dimension_numbers = #tpu.dot_dimension_numbers<[1], [0], [0], [1], [0, 0, 1, 1], [], []>} : vector<16x32xf32>, vector<32x96xf32>, vector<16x96xf32> -> vector<16x96xf32>
    %36 = vector.broadcast %5 : vector<1x96xf32> to vector<16x96xf32>
    %37 = arith.addf %35, %36 : vector<16x96xf32>
    %38 = vector.extract_strided_slice %37 {offsets = [0, 0], sizes = [16, 8], strides = [1, 1]} : vector<16x96xf32> to vector<16x8xf32>
    %39 = vector.shape_cast %38 : vector<16x8xf32> to vector<2x8x8xf32>
    %40 = vector.extract_strided_slice %37 {offsets = [0, 32], sizes = [16, 8], strides = [1, 1]} : vector<16x96xf32> to vector<16x8xf32>
    %41 = vector.shape_cast %40 : vector<16x8xf32> to vector<2x8x8xf32>
    %42 = vector.extract_strided_slice %37 {offsets = [0, 64], sizes = [16, 8], strides = [1, 1]} : vector<16x96xf32> to vector<16x8xf32>
    %43 = vector.shape_cast %42 : vector<16x8xf32> to vector<2x8x8xf32>
    "tpu.trace_start"() <{level = 10 : i32, message = "bqd,bkd->bqk"}> : () -> ()
    %cst_19 = arith.constant dense<0.000000e+00> : vector<2x8x8xf32>
    %44 = tpu.matmul %39, %41, %cst_19 {dimension_numbers = #tpu.dot_dimension_numbers<[2], [2], [1], [1], [0, 0, 0, 1, 1, 1], [0], [0]>} : vector<2x8x8xf32>, vector<2x8x8xf32>, vector<2x8x8xf32> -> vector<2x8x8xf32>
    "tpu.trace_stop"() : () -> ()
    %cst_20 = arith.constant dense<0xFF800000> : vector<2x8xf32>
    %45 = vector.multi_reduction <maximumf>, %44, %cst_20 [2] : vector<2x8x8xf32> to vector<2x8xf32>
    %46 = vector.shape_cast %45 : vector<2x8xf32> to vector<2x8x1xf32>
    %47 = vector.broadcast %46 : vector<2x8x1xf32> to vector<2x8x8xf32>
    %48 = arith.subf %44, %47 : vector<2x8x8xf32>
    %49 = math.exp %48 : vector<2x8x8xf32>
    %cst_21 = arith.constant dense<0.000000e+00> : vector<2x8xf32>
    %50 = vector.multi_reduction <add>, %49, %cst_21 [2] : vector<2x8x8xf32> to vector<2x8xf32>
    %51 = vector.shape_cast %50 : vector<2x8xf32> to vector<2x8x1xf32>
    %52 = tpu.reciprocal %51 : vector<2x8x1xf32> -> vector<2x8x1xf32>
    %53 = vector.broadcast %52 : vector<2x8x1xf32> to vector<2x8x8xf32>
    %54 = arith.mulf %49, %53 : vector<2x8x8xf32>
    "tpu.trace_start"() <{level = 10 : i32, message = "bqk,bkd->bqd"}> : () -> ()
    %cst_22 = arith.constant dense<0.000000e+00> : vector<2x8x8xf32>
    %55 = tpu.matmul %54, %43, %cst_22 {dimension_numbers = #tpu.dot_dimension_numbers<[2], [1], [1], [2], [0, 0, 0, 1, 1, 2], [0], [0]>} : vector<2x8x8xf32>, vector<2x8x8xf32>, vector<2x8x8xf32> -> vector<2x8x8xf32>
    "tpu.trace_stop"() : () -> ()
    %56 = vector.shape_cast %55 : vector<2x8x8xf32> to vector<16x8xf32>
    %57 = vector.extract_strided_slice %37 {offsets = [0, 8], sizes = [16, 8], strides = [1, 1]} : vector<16x96xf32> to vector<16x8xf32>
    %58 = vector.shape_cast %57 : vector<16x8xf32> to vector<2x8x8xf32>
    %59 = vector.extract_strided_slice %37 {offsets = [0, 40], sizes = [16, 8], strides = [1, 1]} : vector<16x96xf32> to vector<16x8xf32>
    %60 = vector.shape_cast %59 : vector<16x8xf32> to vector<2x8x8xf32>
    %61 = vector.extract_strided_slice %37 {offsets = [0, 72], sizes = [16, 8], strides = [1, 1]} : vector<16x96xf32> to vector<16x8xf32>
    %62 = vector.shape_cast %61 : vector<16x8xf32> to vector<2x8x8xf32>
    "tpu.trace_start"() <{level = 10 : i32, message = "bqd,bkd->bqk"}> : () -> ()
    %cst_23 = arith.constant dense<0.000000e+00> : vector<2x8x8xf32>
    %63 = tpu.matmul %58, %60, %cst_23 {dimension_numbers = #tpu.dot_dimension_numbers<[2], [2], [1], [1], [0, 0, 0, 1, 1, 1], [0], [0]>} : vector<2x8x8xf32>, vector<2x8x8xf32>, vector<2x8x8xf32> -> vector<2x8x8xf32>
    "tpu.trace_stop"() : () -> ()
    %cst_24 = arith.constant dense<0xFF800000> : vector<2x8xf32>
    %64 = vector.multi_reduction <maximumf>, %63, %cst_24 [2] : vector<2x8x8xf32> to vector<2x8xf32>
    %65 = vector.shape_cast %64 : vector<2x8xf32> to vector<2x8x1xf32>
    %66 = vector.broadcast %65 : vector<2x8x1xf32> to vector<2x8x8xf32>
    %67 = arith.subf %63, %66 : vector<2x8x8xf32>
    %68 = math.exp %67 : vector<2x8x8xf32>
    %cst_25 = arith.constant dense<0.000000e+00> : vector<2x8xf32>
    %69 = vector.multi_reduction <add>, %68, %cst_25 [2] : vector<2x8x8xf32> to vector<2x8xf32>
    %70 = vector.shape_cast %69 : vector<2x8xf32> to vector<2x8x1xf32>
    %71 = tpu.reciprocal %70 : vector<2x8x1xf32> -> vector<2x8x1xf32>
    %72 = vector.broadcast %71 : vector<2x8x1xf32> to vector<2x8x8xf32>
    %73 = arith.mulf %68, %72 : vector<2x8x8xf32>
    "tpu.trace_start"() <{level = 10 : i32, message = "bqk,bkd->bqd"}> : () -> ()
    %cst_26 = arith.constant dense<0.000000e+00> : vector<2x8x8xf32>
    %74 = tpu.matmul %73, %62, %cst_26 {dimension_numbers = #tpu.dot_dimension_numbers<[2], [1], [1], [2], [0, 0, 0, 1, 1, 2], [0], [0]>} : vector<2x8x8xf32>, vector<2x8x8xf32>, vector<2x8x8xf32> -> vector<2x8x8xf32>
    "tpu.trace_stop"() : () -> ()
    %75 = vector.shape_cast %74 : vector<2x8x8xf32> to vector<16x8xf32>
    %76 = vector.extract_strided_slice %37 {offsets = [0, 16], sizes = [16, 8], strides = [1, 1]} : vector<16x96xf32> to vector<16x8xf32>
    %77 = vector.shape_cast %76 : vector<16x8xf32> to vector<2x8x8xf32>
    %78 = vector.extract_strided_slice %37 {offsets = [0, 48], sizes = [16, 8], strides = [1, 1]} : vector<16x96xf32> to vector<16x8xf32>
    %79 = vector.shape_cast %78 : vector<16x8xf32> to vector<2x8x8xf32>
    %80 = vector.extract_strided_slice %37 {offsets = [0, 80], sizes = [16, 8], strides = [1, 1]} : vector<16x96xf32> to vector<16x8xf32>
    %81 = vector.shape_cast %80 : vector<16x8xf32> to vector<2x8x8xf32>
    "tpu.trace_start"() <{level = 10 : i32, message = "bqd,bkd->bqk"}> : () -> ()
    %cst_27 = arith.constant dense<0.000000e+00> : vector<2x8x8xf32>
    %82 = tpu.matmul %77, %79, %cst_27 {dimension_numbers = #tpu.dot_dimension_numbers<[2], [2], [1], [1], [0, 0, 0, 1, 1, 1], [0], [0]>} : vector<2x8x8xf32>, vector<2x8x8xf32>, vector<2x8x8xf32> -> vector<2x8x8xf32>
    "tpu.trace_stop"() : () -> ()
    %cst_28 = arith.constant dense<0xFF800000> : vector<2x8xf32>
    %83 = vector.multi_reduction <maximumf>, %82, %cst_28 [2] : vector<2x8x8xf32> to vector<2x8xf32>
    %84 = vector.shape_cast %83 : vector<2x8xf32> to vector<2x8x1xf32>
    %85 = vector.broadcast %84 : vector<2x8x1xf32> to vector<2x8x8xf32>
    %86 = arith.subf %82, %85 : vector<2x8x8xf32>
    %87 = math.exp %86 : vector<2x8x8xf32>
    %cst_29 = arith.constant dense<0.000000e+00> : vector<2x8xf32>
    %88 = vector.multi_reduction <add>, %87, %cst_29 [2] : vector<2x8x8xf32> to vector<2x8xf32>
    %89 = vector.shape_cast %88 : vector<2x8xf32> to vector<2x8x1xf32>
    %90 = tpu.reciprocal %89 : vector<2x8x1xf32> -> vector<2x8x1xf32>
    %91 = vector.broadcast %90 : vector<2x8x1xf32> to vector<2x8x8xf32>
    %92 = arith.mulf %87, %91 : vector<2x8x8xf32>
    "tpu.trace_start"() <{level = 10 : i32, message = "bqk,bkd->bqd"}> : () -> ()
    %cst_30 = arith.constant dense<0.000000e+00> : vector<2x8x8xf32>
    %93 = tpu.matmul %92, %81, %cst_30 {dimension_numbers = #tpu.dot_dimension_numbers<[2], [1], [1], [2], [0, 0, 0, 1, 1, 2], [0], [0]>} : vector<2x8x8xf32>, vector<2x8x8xf32>, vector<2x8x8xf32> -> vector<2x8x8xf32>
    "tpu.trace_stop"() : () -> ()
    %94 = vector.shape_cast %93 : vector<2x8x8xf32> to vector<16x8xf32>
    %95 = vector.extract_strided_slice %37 {offsets = [0, 24], sizes = [16, 8], strides = [1, 1]} : vector<16x96xf32> to vector<16x8xf32>
    %96 = vector.shape_cast %95 : vector<16x8xf32> to vector<2x8x8xf32>
    %97 = vector.extract_strided_slice %37 {offsets = [0, 56], sizes = [16, 8], strides = [1, 1]} : vector<16x96xf32> to vector<16x8xf32>
    %98 = vector.shape_cast %97 : vector<16x8xf32> to vector<2x8x8xf32>
    %99 = vector.extract_strided_slice %37 {offsets = [0, 88], sizes = [16, 8], strides = [1, 1]} : vector<16x96xf32> to vector<16x8xf32>
    %100 = vector.shape_cast %99 : vector<16x8xf32> to vector<2x8x8xf32>
    "tpu.trace_start"() <{level = 10 : i32, message = "bqd,bkd->bqk"}> : () -> ()
    %cst_31 = arith.constant dense<0.000000e+00> : vector<2x8x8xf32>
    %101 = tpu.matmul %96, %98, %cst_31 {dimension_numbers = #tpu.dot_dimension_numbers<[2], [2], [1], [1], [0, 0, 0, 1, 1, 1], [0], [0]>} : vector<2x8x8xf32>, vector<2x8x8xf32>, vector<2x8x8xf32> -> vector<2x8x8xf32>
    "tpu.trace_stop"() : () -> ()
    %cst_32 = arith.constant dense<0xFF800000> : vector<2x8xf32>
    %102 = vector.multi_reduction <maximumf>, %101, %cst_32 [2] : vector<2x8x8xf32> to vector<2x8xf32>
    %103 = vector.shape_cast %102 : vector<2x8xf32> to vector<2x8x1xf32>
    %104 = vector.broadcast %103 : vector<2x8x1xf32> to vector<2x8x8xf32>
    %105 = arith.subf %101, %104 : vector<2x8x8xf32>
    %106 = math.exp %105 : vector<2x8x8xf32>
    %cst_33 = arith.constant dense<0.000000e+00> : vector<2x8xf32>
    %107 = vector.multi_reduction <add>, %106, %cst_33 [2] : vector<2x8x8xf32> to vector<2x8xf32>
    %108 = vector.shape_cast %107 : vector<2x8xf32> to vector<2x8x1xf32>
    %109 = tpu.reciprocal %108 : vector<2x8x1xf32> -> vector<2x8x1xf32>
    %110 = vector.broadcast %109 : vector<2x8x1xf32> to vector<2x8x8xf32>
    %111 = arith.mulf %106, %110 : vector<2x8x8xf32>
    "tpu.trace_start"() <{level = 10 : i32, message = "bqk,bkd->bqd"}> : () -> ()
    %cst_34 = arith.constant dense<0.000000e+00> : vector<2x8x8xf32>
    %112 = tpu.matmul %111, %100, %cst_34 {dimension_numbers = #tpu.dot_dimension_numbers<[2], [1], [1], [2], [0, 0, 0, 1, 1, 2], [0], [0]>} : vector<2x8x8xf32>, vector<2x8x8xf32>, vector<2x8x8xf32> -> vector<2x8x8xf32>
    "tpu.trace_stop"() : () -> ()
    %113 = vector.shape_cast %112 : vector<2x8x8xf32> to vector<16x8xf32>
    %114 = tpu.concatenate %56, %75, %94, %113 in 1 : vector<16x8xf32>, vector<16x8xf32>, vector<16x8xf32>, vector<16x8xf32> -> vector<16x32xf32>
    %cst_35 = arith.constant dense<0.000000e+00> : vector<16x32xf32>
    %115 = tpu.matmul %114, %10, %cst_35 {dimension_numbers = #tpu.dot_dimension_numbers<[1], [0], [0], [1], [0, 0, 1, 1], [], []>} : vector<16x32xf32>, vector<32x32xf32>, vector<16x32xf32> -> vector<16x32xf32>
    %116 = vector.broadcast %6 : vector<1x32xf32> to vector<16x32xf32>
    %117 = arith.addf %115, %116 : vector<16x32xf32>
    %118 = arith.addf %0, %117 : vector<16x32xf32>
    %cst_36 = arith.constant dense<0.000000e+00> : vector<16xf32>
    %119 = vector.multi_reduction <add>, %118, %cst_36 [1] : vector<16x32xf32> to vector<16xf32>
    %120 = vector.shape_cast %119 : vector<16xf32> to vector<16x1xf32>
    %cst_37 = arith.constant 3.200000e+01 : f32
    %121 = vector.broadcast %cst_37 : f32 to vector<16x1xf32>
    %122 = arith.divf %120, %121 : vector<16x1xf32>
    %123 = vector.broadcast %122 : vector<16x1xf32> to vector<16x32xf32>
    %124 = arith.subf %118, %123 : vector<16x32xf32>
    %125 = arith.mulf %124, %124 : vector<16x32xf32>
    %cst_38 = arith.constant dense<0.000000e+00> : vector<16xf32>
    %126 = vector.multi_reduction <add>, %125, %cst_38 [1] : vector<16x32xf32> to vector<16xf32>
    %127 = vector.shape_cast %126 : vector<16xf32> to vector<16x1xf32>
    %cst_39 = arith.constant 3.200000e+01 : f32
    %128 = vector.broadcast %cst_39 : f32 to vector<16x1xf32>
    %129 = arith.divf %127, %128 : vector<16x1xf32>
    %130 = vector.broadcast %122 : vector<16x1xf32> to vector<16x32xf32>
    %131 = arith.subf %118, %130 : vector<16x32xf32>
    %cst_40 = arith.constant 9.99999997E-7 : f32
    %132 = vector.broadcast %cst_40 : f32 to vector<16x1xf32>
    %133 = arith.addf %129, %132 : vector<16x1xf32>
    %134 = math.rsqrt %133 : vector<16x1xf32>
    %135 = vector.broadcast %134 : vector<16x1xf32> to vector<16x32xf32>
    %136 = arith.mulf %131, %135 : vector<16x32xf32>
    %137 = vector.broadcast %3 : vector<1x32xf32> to vector<16x32xf32>
    %138 = arith.mulf %136, %137 : vector<16x32xf32>
    %139 = vector.broadcast %4 : vector<1x32xf32> to vector<16x32xf32>
    %140 = arith.addf %138, %139 : vector<16x32xf32>
    %cst_41 = arith.constant dense<0.000000e+00> : vector<16x64xf32>
    %141 = tpu.matmul %140, %11, %cst_41 {dimension_numbers = #tpu.dot_dimension_numbers<[1], [0], [0], [1], [0, 0, 1, 1], [], []>} : vector<16x32xf32>, vector<32x64xf32>, vector<16x64xf32> -> vector<16x64xf32>
    %142 = vector.broadcast %7 : vector<1x64xf32> to vector<16x64xf32>
    %143 = arith.addf %141, %142 : vector<16x64xf32>
    %cst_42 = arith.constant 5.000000e-01 : f32
    %144 = vector.broadcast %cst_42 : f32 to vector<16x64xf32>
    %145 = arith.mulf %144, %143 : vector<16x64xf32>
    %cst_43 = arith.constant 0.707106769 : f32
    %146 = vector.broadcast %cst_43 : f32 to vector<16x64xf32>
    %147 = arith.mulf %143, %146 : vector<16x64xf32>
    %148 = math.erf %147 : vector<16x64xf32>
    %cst_44 = arith.constant 1.000000e+00 : f32
    %149 = vector.broadcast %cst_44 : f32 to vector<16x64xf32>
    %150 = arith.addf %149, %148 : vector<16x64xf32>
    %151 = arith.mulf %145, %150 : vector<16x64xf32>
    %cst_45 = arith.constant dense<0.000000e+00> : vector<16x32xf32>
    %152 = tpu.matmul %151, %12, %cst_45 {dimension_numbers = #tpu.dot_dimension_numbers<[1], [0], [0], [1], [0, 0, 1, 1], [], []>} : vector<16x64xf32>, vector<64x32xf32>, vector<16x32xf32> -> vector<16x32xf32>
    %153 = vector.broadcast %8 : vector<1x32xf32> to vector<16x32xf32>
    %154 = arith.addf %152, %153 : vector<16x32xf32>
    %155 = arith.addf %118, %154 : vector<16x32xf32>
    %c0_46 = arith.constant 0 : index
    %c0_47 = arith.constant 0 : index
    %156 = vector.load %arg3[%c0_46, %c0_47] : memref<16x32xf32, #tpu.memory_space<vmem>>, vector<16x32xf32>
    tpu.vector_store %arg3[%c0_46, %c0_47], %155 {strides = array<i32>} : memref<16x32xf32, #tpu.memory_space<vmem>>, vector<16x32xf32>,
    return
  }
  func.func @transform_0(%arg0: i32) -> (i32, i32) {
    %c0_i32 = arith.constant 0 : i32
    %c0_i32_0 = arith.constant 0 : i32
    %c0_i32_1 = arith.constant 0 : i32
    return %c0_i32, %c0_i32_0 : i32, i32
  }
  func.func @transform_1(%arg0: i32) -> (i32, i32) {
    %c0_i32 = arith.constant 0 : i32
    %c0_i32_0 = arith.constant 0 : i32
    %c0_i32_1 = arith.constant 0 : i32
    return %c0_i32, %c0_i32_0 : i32, i32
  }
  func.func @transform_2(%arg0: i32) -> (i32, i32) {
    %c0_i32 = arith.constant 0 : i32
    %c0_i32_0 = arith.constant 0 : i32
    %c0_i32_1 = arith.constant 0 : i32
    return %c0_i32, %c0_i32_0 : i32, i32
  }
}

</mosaic_0001>

<llo_original>
// kernel: tpu_custom_call.1
$region0: #{tpu_custom_call.1}
  #allocation0 [shape = 'u32[]', space=smem, size = 0x4, offset = 0x4, fixed_abs, tag = 'smem constant byte address 0x4 - core index']
  #allocation1 [shape = 'u32[144,128]{1,0:T(1,128)}', space=vmem, size = 0x12000, scoped, tag = 'internal scratch']
  %s0 = inlined_call_operand.hbm [shape: f32[16,32], index: 0, kind: input, shape index: {}]
  %s1 = inlined_call_operand.hbm [shape: f32[168,128], index: 1, kind: input, shape index: {}]
  %s2 = inlined_call_operand.hbm [shape: f32[16,32], index: 2, kind: output, shape index: {}]
  %s3 = sld [smem:[#allocation0]]
  $region26: #{tpu_custom_call.1} parent=0
    _
  %s5 = ssub.s32 1, %s3
  %s6 = scalar_select 0, %s5, %s3
  $region1: #{tpu_custom_call.1} parent=0
    #allocation2 [shape = 'u8[8192]{0}', space=vmem, size = 0x2000, scoped, tag = 'input window, operand 0, single buffered']
    #allocation3 [shape = 's32[1]{0}', space=sflag, size = 0x4, scoped, tag = 'scoped memory for tpu_custom_call.1']
    #allocation4 [shape = 's32[1]{0}', space=sflag, size = 0x4, scoped, tag = 'scoped memory for tpu_custom_call.1']
    #allocation5 [shape = 'u8[86016]{0}', space=vmem, size = 0x15000, scoped, tag = 'input window, operand 1, single buffered']
    #allocation6 [shape = 's32[1]{0}', space=sflag, size = 0x4, scoped, tag = 'scoped memory for tpu_custom_call.1']
    #allocation7 [shape = 'u8[8192]{0}', space=vmem, size = 0x2000, scoped, tag = 'output window, operand 0, single buffered']
    %7 = vsyncpa [#allocation3], 0
    %8 = vsyncpa [#allocation6], 0
    %9 = vsyncpa [#allocation4], 0
    // Predicated region
    $region2: #{tpu_custom_call.1} parent=1 // pred_check
      _
    $region3: #{tpu_custom_call.1} parent=1 // pred_check_branch
      %11 = sbr.rel (0) target = $region5
    $region4: #{tpu_custom_call.1} parent=1 // pred_region
      %s13 = ssub.s32 256, 256
      %14 = vsyncadd [#allocation3], %s13
      %s15 = sshll.u32 [#allocation2], 4
      %s16 = int_to_ptr.vmem [resolvable:$true] %s15
      %21 = dma.hbm_to_vmem [thread:$0]  %s0, 256, %s16, [#allocation3], 128, 128, 8
    $region5: #{tpu_custom_call.1} parent=1 // pred_fallthru
      _
    // Predicated region
    $region6: #{tpu_custom_call.1} parent=1 // pred_check
      _
    $region7: #{tpu_custom_call.1} parent=1 // pred_check_branch
      %23 = sbr.rel (0) target = $region9
    $region8: #{tpu_custom_call.1} parent=1 // pred_region
      %s25 = ssub.s32 2688, 2688
      %26 = vsyncadd [#allocation6], %s25
      %s27 = sshll.u32 [#allocation5], 4
      %s28 = int_to_ptr.vmem [resolvable:$true] %s27
      %33 = dma.hbm_to_vmem [thread:$0]  %s1, 2688, %s28, [#allocation6], 128, 128, 8
    $region9: #{tpu_custom_call.1} parent=1 // pred_fallthru
      _
    // Predicated region
    $region10: #{tpu_custom_call.1} parent=1 // pred_check
      _
    $region11: #{tpu_custom_call.1} parent=1 // pred_check_branch
      %35 = sbr.rel (0) target = $region13
    $region12: #{tpu_custom_call.1} parent=1 // pred_region
      %36 = dma.done [#allocation3], 256
    $region13: #{tpu_custom_call.1} parent=1 // pred_fallthru
      _
    // Predicated region
    $region14: #{tpu_custom_call.1} parent=1 // pred_check
      _
    $region15: #{tpu_custom_call.1} parent=1 // pred_check_branch
      %38 = sbr.rel (0) target = $region17
    $region16: #{tpu_custom_call.1} parent=1 // pred_region
      %39 = dma.done [#allocation6], 2688
    $region17: #{tpu_custom_call.1} parent=1 // pred_fallthru
      _
    %v40 = vld [vmem:[#allocation2] sm:$0xff]
    %v41 = vld [vmem:[#allocation2 + $0x8] sm:$0xff]
    %v42 = vld [vmem:[#allocation5] sm:$0x1]
    %v43 = vld [vmem:[#allocation5 + $0x1] sm:$0x1]
    %v44 = vld [vmem:[#allocation5 + $0x2] sm:$0x1]
    %v45 = vld [vmem:[#allocation5 + $0x3] sm:$0x1]
    %v46 = vld [vmem:[#allocation5 + $0x4] sm:$0x1]
    %v47 = vld [vmem:[#allocation5 + $0x5] sm:$0x1]
    %v48 = vld [vmem:[#allocation5 + $0x6] sm:$0x1]
    %v49 = vld [vmem:[#allocation5 + $0x7] sm:$0x1]
    %v50 = vld [vmem:[#allocation5 + $0x8] sm:$0xff]
    %v51 = vld [vmem:[#allocation5 + $0x10] sm:$0xff]
    %v52 = vld [vmem:[#allocation5 + $0x18] sm:$0xff]
    %v53 = vld [vmem:[#allocation5 + $0x20] sm:$0xff]
    %v54 = vld [vmem:[#allocation5 + $0x28] sm:$0xff]
    %v55 = vld [vmem:[#allocation5 + $0x30] sm:$0xff]
    %v56 = vld [vmem:[#allocation5 + $0x38] sm:$0xff]
    %v57 = vld [vmem:[#allocation5 + $0x40] sm:$0xff]
    %v58 = vld [vmem:[#allocation5 + $0x48] sm:$0xff]
    %v59 = vld [vmem:[#allocation5 + $0x50] sm:$0xff]
    %v60 = vld [vmem:[#allocation5 + $0x58] sm:$0xff]
    %v61 = vld [vmem:[#allocation5 + $0x60] sm:$0xff]
    %v62 = vld [vmem:[#allocation5 + $0x68] sm:$0xff]
    %v63 = vld [vmem:[#allocation5 + $0x70] sm:$0xff]
    %v64 = vld [vmem:[#allocation5 + $0x78] sm:$0xff]
    %v65 = vld [vmem:[#allocation5 + $0x80] sm:$0xff]
    %v66 = vld [vmem:[#allocation5 + $0x88] sm:$0xff]
    %v67 = vld [vmem:[#allocation5 + $0x90] sm:$0xff]
    %v68 = vld [vmem:[#allocation5 + $0x98] sm:$0xff]
    %v69 = vld [vmem:[#allocation5 + $0xa0] sm:$0xff]
    %vm70 = vcmask 261120
    %v71 = vsel %vm70, %v40, 0.0
    %72 = vadd.xlane.f32.xlu0 %v71
    %v73 = vpop.xlane.xlu0 %72
    %v74 = vsel %vm70, %v41, 0.0
    %75 = vadd.xlane.f32.xlu0 %v74
    %v76 = vpop.xlane.xlu0 %75
    %v77 = vrcp.pop 32.0
    %v78 = vmul.f32 %v73, %v77
    %v79 = vmul.f32 %v76, %v77
    %v80 = vsub.f32 %v40, %v78
    %v81 = vsub.f32 %v41, %v79
    %v82 = vmul.f32 %v80, %v80
    %v83 = vmul.f32 %v81, %v81
    %v84 = vsel %vm70, %v82, 0.0
    %85 = vadd.xlane.f32.xlu0 %v84
    %v86 = vpop.xlane.xlu0 %85
    %v87 = vsel %vm70, %v83, 0.0
    %88 = vadd.xlane.f32.xlu0 %v87
    %v89 = vpop.xlane.xlu0 %88
    %v90 = vmul.f32 %v86, %v77
    %v91 = vmul.f32 %v89, %v77
    %v92 = vadd.f32 %v90, 1e-06
    %v93 = vadd.f32 %v91, 1e-06
    %v94 = vrsqrt.pop %v92
    %v95 = vrsqrt.pop %v93
    %v96 = vmul.f32 %v80, %v94
    %v97 = vmul.f32 %v81, %v95
    %v98 = vlaneseq
    %v99 = vshrl.u32 %v98, 7
    %v100 = vsub.s32 0, %v99
    %v101 = vrot.slane %v42, %v100
    %v102 = vmul.f32 %v96, %v101
    %v103 = vmul.f32 %v97, %v101
    %v104 = vlaneseq
    %v105 = vshrl.u32 %v104, 7
    %v106 = vsub.s32 0, %v105
    %v107 = vrot.slane %v43, %v106
    %v108 = vadd.f32 %v102, %v107
    %v109 = vadd.f32 %v103, %v107
    %v110 = vlaneseq
    %v111 = vshrl.u32 %v110, 7
    %v112 = vsub.s32 0, %v111
    %v113 = vrot.slane %v46, %v112
    %v115 = vsel %vm70, %v108, 0
    %v118 = vsel %vm70, %v109, 0
    %120 = vmatprep.subr.mxu0 0.0
    %121 = vmatpush1.msra.mxu0 %v50
    %122 = vmatprep.subr.mxu0 0.0
    %123 = vmatpush1.msra.mxu0 %v51
    %124 = vmatprep.subr.mxu0 0.0
    %125 = vmatpush1.msra.mxu0 %v52
    %126 = vmatprep.subr.mxu0 0.0
    %127 = vmatpush1.msra.mxu0 %v53
    %128 = vmatprep.subr.mxu0 0.0
    %129 = vmatpush1.msra.mxu0 0.0
    %130 = vmatprep.subr.mxu0 0.0
    %131 = vmatpush1.msra.mxu0 0.0
    %132 = vmatprep.subr.mxu0 0.0
    %133 = vmatpush1.msra.mxu0 0.0
    %134 = vmatprep.subr.mxu0 0.0
    %135 = vmatpush1.msra.mxu0 0.0
    %136 = vmatprep.subr.mxu0 0.0
    %137 = vmatpush1.msra.mxu0 0.0
    %138 = vmatprep.subr.mxu0 0.0
    %139 = vmatpush1.msra.mxu0 0.0
    %140 = vmatprep.subr.mxu0 0.0
    %141 = vmatpush1.msra.mxu0 0.0
    %142 = vmatprep.subr.mxu0 0.0
    %143 = vmatpush1.msra.mxu0 0.0
    %144 = vmatprep.subr.mxu0 0.0
    %145 = vmatpush1.msra.mxu0 0.0
    %146 = vmatprep.subr.mxu0 0.0
    %147 = vmatpush1.msra.mxu0 0.0
    %148 = vmatprep.subr.mxu0 0.0
    %149 = vmatpush1.msra.mxu0 0.0
    %150 = vmatprep.subr.mxu0 0.0
    %151 = vmatpush1.msra.mxu0 0.0
    %152 = vmatprep.subr.mxu0 0.0
    %153 = vmatpush1.msra.mxu0 0.0
    %154 = vmatprep.subr.mxu0 0.0
    %155 = vmatpush1.msra.mxu0 0.0
    %156 = vmatprep.subr.mxu0 0.0
    %157 = vmatpush1.msra.mxu0 0.0
    %158 = vmatprep.subr.mxu0 0.0
    %159 = vmatpush1.msra.mxu0 0.0
    %160 = vmatprep.subr.mxu0 0.0
    %161 = vmatpush1.msra.mxu0 0.0
    %162 = vmatprep.subr.mxu0 0.0
    %163 = vmatpush1.msra.mxu0 0.0
    %164 = vmatprep.subr.mxu0 0.0
    %165 = vmatpush1.msra.mxu0 0.0
    %166 = vmatprep.subr.mxu0 0.0
    %167 = vmatpush1.msra.mxu0 0.0
    %168 = vmatprep.subr.mxu0 0.0
    %169 = vmatpush1.msra.mxu0 0.0
    %170 = vmatprep.subr.mxu0 0.0
    %171 = vmatpush1.msra.mxu0 0.0
    %172 = vmatprep.subr.mxu0 0.0
    %173 = vmatpush1.msra.mxu0 0.0
    %174 = vmatprep.subr.mxu0 0.0
    %175 = vmatpush1.msra.mxu0 0.0
    %176 = vmatprep.subr.mxu0 0.0
    %177 = vmatpush1.msra.mxu0 0.0
    %178 = vmatprep.subr.mxu0 0.0
    %179 = vmatpush1.msra.mxu0 0.0
    %180 = vmatprep.subr.mxu0 0.0
    %181 = vmatpush1.msra.mxu0 0.0
    %182 = vmatprep.subr.mxu0 0.0
    %183 = vmatpush1.msra.mxu0 0.0
    %184 = vmatprep.mubr.f32.mxu0 0.0
    %185 = vmatmul.mubr.f32.gmra.mrb[0].mxu0 %v115
    %v186 = vpop.f32.mrb[0].mxu0
    %v187 = vadd.f32 %v113, %v186
    %v188 = vpop.f32.mrb[0].mxu0
    %189 = vmatprep.mubr.f32.mxu0 0.0
    %190 = vmatmul.mubr.f32.gmra.mrb[0].mxu0 %v118
    %v191 = vpop.f32.mrb[0].mxu0
    %v192 = vadd.f32 %v113, %v191
    %v193 = vpop.f32.mrb[0].mxu0
    %194 = vdwg.mxu0
    %196 = vrot.lane.b32.xlu0 %v187, 96
    %v197 = vpop.permute.xlu0 %196
    %vm198 = vcmask 64512
    %v199 = vsel %vm198, %v187, 0
    %v201 = vsel %vm198, %v197, 0
    %203 = vmatprep.subr.mxu0 0.0
    %204 = vmatpush1.xpose.msra.mxu0 %v201
    %205 = vmatprep.subr.mxu0 0.0
    %206 = vmatpush1.xpose.msra.mxu0 0.0
    %207 = vmatprep.subr.mxu0 0.0
    %208 = vmatpush1.xpose.msra.mxu0 0.0
    %209 = vmatprep.subr.mxu0 0.0
    %210 = vmatpush1.xpose.msra.mxu0 0.0
    %211 = vmatprep.subr.mxu0 0.0
    %212 = vmatpush1.xpose.msra.mxu0 0.0
    %213 = vmatprep.subr.mxu0 0.0
    %214 = vmatpush1.xpose.msra.mxu0 0.0
    %215 = vmatprep.subr.mxu0 0.0
    %216 = vmatpush1.xpose.msra.mxu0 0.0
    %217 = vmatprep.subr.mxu0 0.0
    %218 = vmatpush1.xpose.msra.mxu0 0.0
    %219 = vmatprep.subr.mxu0 0.0
    %220 = vmatpush1.xpose.msra.mxu0 0.0
    %221 = vmatprep.subr.mxu0 0.0
    %222 = vmatpush1.xpose.msra.mxu0 0.0
    %223 = vmatprep.subr.mxu0 0.0
    %224 = vmatpush1.xpose.msra.mxu0 0.0
    %225 = vmatprep.subr.mxu0 0.0
    %226 = vmatpush1.xpose.msra.mxu0 0.0
    %227 = vmatprep.subr.mxu0 0.0
    %228 = vmatpush1.xpose.msra.mxu0 0.0
    %229 = vmatprep.subr.mxu0 0.0
    %230 = vmatpush1.xpose.msra.mxu0 0.0
    %231 = vmatprep.subr.mxu0 0.0
    %232 = vmatpush1.xpose.msra.mxu0 0.0
    %233 = vmatprep.subr.mxu0 0.0
    %234 = vmatpush1.xpose.msra.mxu0 0.0
    %235 = vmatprep.subr.mxu0 0.0
    %236 = vmatpush1.xpose.msra.mxu0 0.0
    %237 = vmatprep.subr.mxu0 0.0
    %238 = vmatpush1.xpose.msra.mxu0 0.0
    %239 = vmatprep.subr.mxu0 0.0
    %240 = vmatpush1.xpose.msra.mxu0 0.0
    %241 = vmatprep.subr.mxu0 0.0
    %242 = vmatpush1.xpose.msra.mxu0 0.0
    %243 = vmatprep.subr.mxu0 0.0
    %244 = vmatpush1.xpose.msra.mxu0 0.0
    %245 = vmatprep.subr.mxu0 0.0
    %246 = vmatpush1.xpose.msra.mxu0 0.0
    %247 = vmatprep.subr.mxu0 0.0
    %248 = vmatpush1.xpose.msra.mxu0 0.0
    %249 = vmatprep.subr.mxu0 0.0
    %250 = vmatpush1.xpose.msra.mxu0 0.0
    %251 = vmatprep.subr.mxu0 0.0
    %252 = vmatpush1.xpose.msra.mxu0 0.0
    %253 = vmatprep.subr.mxu0 0.0
    %254 = vmatpush1.xpose.msra.mxu0 0.0
    %255 = vmatprep.subr.mxu0 0.0
    %256 = vmatpush1.xpose.msra.mxu0 0.0
    %257 = vmatprep.subr.mxu0 0.0
    %258 = vmatpush1.xpose.msra.mxu0 0.0
    %259 = vmatprep.subr.mxu0 0.0
    %260 = vmatpush1.xpose.msra.mxu0 0.0
    %261 = vmatprep.subr.mxu0 0.0
    %262 = vmatpush1.xpose.msra.mxu0 0.0
    %263 = vmatprep.subr.mxu0 0.0
    %264 = vmatpush1.xpose.msra.mxu0 0.0
    %265 = vmatprep.subr.mxu0 0.0
    %266 = vmatpush1.xpose.msra.mxu0 0.0
    %267 = vmatprep.mubr.f32.mxu0 0.0
    %268 = vmatmul.mubr.f32.gmra.mrb[0].mxu0 %v199
    %v269 = vpop.f32.mrb[0].mxu0
    %v270 = vadd.f32 0.0, %v269
    %v271 = vpop.f32.mrb[0].mxu0
    %272 = vdwg.mxu0
    %274 = vrot.lane.b32.xlu0 %v192, 96
    %v275 = vpop.permute.xlu0 %274
    %v276 = vsel %vm198, %v192, 0
    %v278 = vsel %vm198, %v275, 0
    %280 = vmatprep.subr.mxu0 0.0
    %281 = vmatpush1.xpose.msra.mxu0 %v278
    %282 = vmatprep.subr.mxu0 0.0
    %283 = vmatpush1.xpose.msra.mxu0 0.0
    %284 = vmatprep.subr.mxu0 0.0
    %285 = vmatpush1.xpose.msra.mxu0 0.0
    %286 = vmatprep.subr.mxu0 0.0
    %287 = vmatpush1.xpose.msra.mxu0 0.0
    %288 = vmatprep.subr.mxu0 0.0
    %289 = vmatpush1.xpose.msra.mxu0 0.0
    %290 = vmatprep.subr.mxu0 0.0
    %291 = vmatpush1.xpose.msra.mxu0 0.0
    %292 = vmatprep.subr.mxu0 0.0
    %293 = vmatpush1.xpose.msra.mxu0 0.0
    %294 = vmatprep.subr.mxu0 0.0
    %295 = vmatpush1.xpose.msra.mxu0 0.0
    %296 = vmatprep.subr.mxu0 0.0
    %297 = vmatpush1.xpose.msra.mxu0 0.0
    %298 = vmatprep.subr.mxu0 0.0
    %299 = vmatpush1.xpose.msra.mxu0 0.0
    %300 = vmatprep.subr.mxu0 0.0
    %301 = vmatpush1.xpose.msra.mxu0 0.0
    %302 = vmatprep.subr.mxu0 0.0
    %303 = vmatpush1.xpose.msra.mxu0 0.0
    %304 = vmatprep.subr.mxu0 0.0
    %305 = vmatpush1.xpose.msra.mxu0 0.0
    %306 = vmatprep.subr.mxu0 0.0
    %307 = vmatpush1.xpose.msra.mxu0 0.0
    %308 = vmatprep.subr.mxu0 0.0
    %309 = vmatpush1.xpose.msra.mxu0 0.0
    %310 = vmatprep.subr.mxu0 0.0
    %311 = vmatpush1.xpose.msra.mxu0 0.0
    %312 = vmatprep.subr.mxu0 0.0
    %313 = vmatpush1.xpose.msra.mxu0 0.0
    %314 = vmatprep.subr.mxu0 0.0
    %315 = vmatpush1.xpose.msra.mxu0 0.0
    %316 = vmatprep.subr.mxu0 0.0
    %317 = vmatpush1.xpose.msra.mxu0 0.0
    %318 = vmatprep.subr.mxu0 0.0
    %319 = vmatpush1.xpose.msra.mxu0 0.0
    %320 = vmatprep.subr.mxu0 0.0
    %321 = vmatpush1.xpose.msra.mxu0 0.0
    %322 = vmatprep.subr.mxu0 0.0
    %323 = vmatpush1.xpose.msra.mxu0 0.0
    %324 = vmatprep.subr.mxu0 0.0
    %325 = vmatpush1.xpose.msra.mxu0 0.0
    %326 = vmatprep.subr.mxu0 0.0
    %327 = vmatpush1.xpose.msra.mxu0 0.0
    %328 = vmatprep.subr.mxu0 0.0
    %329 = vmatpush1.xpose.msra.mxu0 0.0
    %330 = vmatprep.subr.mxu0 0.0
    %331 = vmatpush1.xpose.msra.mxu0 0.0
    %332 = vmatprep.subr.mxu0 0.0
    %333 = vmatpush1.xpose.msra.mxu0 0.0
    %334 = vmatprep.subr.mxu0 0.0
    %335 = vmatpush1.xpose.msra.mxu0 0.0
    %336 = vmatprep.subr.mxu0 0.0
    %337 = vmatpush1.xpose.msra.mxu0 0.0
    %338 = vmatprep.subr.mxu0 0.0
    %339 = vmatpush1.xpose.msra.mxu0 0.0
    %340 = vmatprep.subr.mxu0 0.0
    %341 = vmatpush1.xpose.msra.mxu0 0.0
    %342 = vmatprep.subr.mxu0 0.0
    %343 = vmatpush1.xpose.msra.mxu0 0.0
    %344 = vmatprep.mubr.f32.mxu0 0.0
    %345 = vmatmul.mubr.f32.gmra.mrb[0].mxu0 %v276
    %v346 = vpop.f32.mrb[0].mxu0
    %v347 = vadd.f32 0.0, %v346
    %v348 = vpop.f32.mrb[0].mxu0
    %349 = vdwg.mxu0
    %v350 = vsel %vm198, %v270, -inf
    %351 = vmax.xlane.f32.xlu0 %v350
    %v352 = vpop.xlane.xlu0 %351
    %v353 = vsel %vm198, %v347, -inf
    %354 = vmax.xlane.f32.xlu0 %v353
    %v355 = vpop.xlane.xlu0 %354
    %v356 = vsub.f32 %v270, %v352
    %v357 = vsub.f32 %v347, %v355
    %v358 = vmul.f32 %v356, 1.442695
    %v359 = vpow.pop %v358
    %v360 = vmul.f32 %v357, 1.442695
    %v361 = vpow.pop %v360
    %v362 = vsel %vm198, %v359, 0.0
    %363 = vadd.xlane.f32.xlu0 %v362
    %v364 = vpop.xlane.xlu0 %363
    %v365 = vsel %vm198, %v361, 0.0
    %366 = vadd.xlane.f32.xlu0 %v365
    %v367 = vpop.xlane.xlu0 %366
    %v368 = vrcp.pop %v364
    %v369 = vrcp.pop %v367
    %v370 = vmul.f32 %v359, %v368
    %v371 = vmul.f32 %v361, %v369
    %372 = vrot.lane.b32.xlu0 %v187, 64
    %v373 = vpop.permute.xlu0 %372
    %v376 = vsel %vm198, %v370, 0
    %378 = vmatprep.subr.mxu0 0.0
    %379 = vmatpush1.msra.mxu0 %v373
    %380 = vmatprep.subr.mxu0 0.0
    %381 = vmatpush1.msra.mxu0 0.0
    %382 = vmatprep.subr.mxu0 0.0
    %383 = vmatpush1.msra.mxu0 0.0
    %384 = vmatprep.subr.mxu0 0.0
    %385 = vmatpush1.msra.mxu0 0.0
    %386 = vmatprep.subr.mxu0 0.0
    %387 = vmatpush1.msra.mxu0 0.0
    %388 = vmatprep.subr.mxu0 0.0
    %389 = vmatpush1.msra.mxu0 0.0
    %390 = vmatprep.subr.mxu0 0.0
    %391 = vmatpush1.msra.mxu0 0.0
    %392 = vmatprep.subr.mxu0 0.0
    %393 = vmatpush1.msra.mxu0 0.0
    %394 = vmatprep.subr.mxu0 0.0
    %395 = vmatpush1.msra.mxu0 0.0
    %396 = vmatprep.subr.mxu0 0.0
    %397 = vmatpush1.msra.mxu0 0.0
    %398 = vmatprep.subr.mxu0 0.0
    %399 = vmatpush1.msra.mxu0 0.0
    %400 = vmatprep.subr.mxu0 0.0
    %401 = vmatpush1.msra.mxu0 0.0
    %402 = vmatprep.subr.mxu0 0.0
    %403 = vmatpush1.msra.mxu0 0.0
    %404 = vmatprep.subr.mxu0 0.0
    %405 = vmatpush1.msra.mxu0 0.0
    %406 = vmatprep.subr.mxu0 0.0
    %407 = vmatpush1.msra.mxu0 0.0
    %408 = vmatprep.subr.mxu0 0.0
    %409 = vmatpush1.msra.mxu0 0.0
    %410 = vmatprep.subr.mxu0 0.0
    %411 = vmatpush1.msra.mxu0 0.0
    %412 = vmatprep.subr.mxu0 0.0
    %413 = vmatpush1.msra.mxu0 0.0
    %414 = vmatprep.subr.mxu0 0.0
    %415 = vmatpush1.msra.mxu0 0.0
    %416 = vmatprep.subr.mxu0 0.0
    %417 = vmatpush1.msra.mxu0 0.0
    %418 = vmatprep.subr.mxu0 0.0
    %419 = vmatpush1.msra.mxu0 0.0
    %420 = vmatprep.subr.mxu0 0.0
    %421 = vmatpush1.msra.mxu0 0.0
    %422 = vmatprep.subr.mxu0 0.0
    %423 = vmatpush1.msra.mxu0 0.0
    %424 = vmatprep.subr.mxu0 0.0
    %425 = vmatpush1.msra.mxu0 0.0
    %426 = vmatprep.subr.mxu0 0.0
    %427 = vmatpush1.msra.mxu0 0.0
    %428 = vmatprep.subr.mxu0 0.0
    %429 = vmatpush1.msra.mxu0 0.0
    %430 = vmatprep.subr.mxu0 0.0
    %431 = vmatpush1.msra.mxu0 0.0
    %432 = vmatprep.subr.mxu0 0.0
    %433 = vmatpush1.msra.mxu0 0.0
    %434 = vmatprep.subr.mxu0 0.0
    %435 = vmatpush1.msra.mxu0 0.0
    %436 = vmatprep.subr.mxu0 0.0
    %437 = vmatpush1.msra.mxu0 0.0
    %438 = vmatprep.subr.mxu0 0.0
    %439 = vmatpush1.msra.mxu0 0.0
    %440 = vmatprep.subr.mxu0 0.0
    %441 = vmatpush1.msra.mxu0 0.0
    %442 = vmatprep.mubr.f32.mxu0 0.0
    %443 = vmatmul.mubr.f32.gmra.mrb[0].mxu0 %v376
    %v444 = vpop.f32.mrb[0].mxu0
    %v445 = vadd.f32 0.0, %v444
    %v446 = vpop.f32.mrb[0].mxu0
    %447 = vdwg.mxu0
    %448 = vrot.lane.b32.xlu0 %v192, 64
    %v449 = vpop.permute.xlu0 %448
    %v452 = vsel %vm198, %v371, 0
    %454 = vmatprep.subr.mxu0 0.0
    %455 = vmatpush1.msra.mxu0 %v449
    %456 = vmatprep.subr.mxu0 0.0
    %457 = vmatpush1.msra.mxu0 0.0
    %458 = vmatprep.subr.mxu0 0.0
    %459 = vmatpush1.msra.mxu0 0.0
    %460 = vmatprep.subr.mxu0 0.0
    %461 = vmatpush1.msra.mxu0 0.0
    %462 = vmatprep.subr.mxu0 0.0
    %463 = vmatpush1.msra.mxu0 0.0
    %464 = vmatprep.subr.mxu0 0.0
    %465 = vmatpush1.msra.mxu0 0.0
    %466 = vmatprep.subr.mxu0 0.0
    %467 = vmatpush1.msra.mxu0 0.0
    %468 = vmatprep.subr.mxu0 0.0
    %469 = vmatpush1.msra.mxu0 0.0
    %470 = vmatprep.subr.mxu0 0.0
    %471 = vmatpush1.msra.mxu0 0.0
    %472 = vmatprep.subr.mxu0 0.0
    %473 = vmatpush1.msra.mxu0 0.0
    %474 = vmatprep.subr.mxu0 0.0
    %475 = vmatpush1.msra.mxu0 0.0
    %476 = vmatprep.subr.mxu0 0.0
    %477 = vmatpush1.msra.mxu0 0.0
    %478 = vmatprep.subr.mxu0 0.0
    %479 = vmatpush1.msra.mxu0 0.0
    %480 = vmatprep.subr.mxu0 0.0
    %481 = vmatpush1.msra.mxu0 0.0
    %482 = vmatprep.subr.mxu0 0.0
    %483 = vmatpush1.msra.mxu0 0.0
    %484 = vmatprep.subr.mxu0 0.0
    %485 = vmatpush1.msra.mxu0 0.0
    %486 = vmatprep.subr.mxu0 0.0
    %487 = vmatpush1.msra.mxu0 0.0
    %488 = vmatprep.subr.mxu0 0.0
    %489 = vmatpush1.msra.mxu0 0.0
    %490 = vmatprep.subr.mxu0 0.0
    %491 = vmatpush1.msra.mxu0 0.0
    %492 = vmatprep.subr.mxu0 0.0
    %493 = vmatpush1.msra.mxu0 0.0
    %494 = vmatprep.subr.mxu0 0.0
    %495 = vmatpush1.msra.mxu0 0.0
    %496 = vmatprep.subr.mxu0 0.0
    %497 = vmatpush1.msra.mxu0 0.0
    %498 = vmatprep.subr.mxu0 0.0
    %499 = vmatpush1.msra.mxu0 0.0
    %500 = vmatprep.subr.mxu0 0.0
    %501 = vmatpush1.msra.mxu0 0.0
    %502 = vmatprep.subr.mxu0 0.0
    %503 = vmatpush1.msra.mxu0 0.0
    %504 = vmatprep.subr.mxu0 0.0
    %505 = vmatpush1.msra.mxu0 0.0
    %506 = vmatprep.subr.mxu0 0.0
    %507 = vmatpush1.msra.mxu0 0.0
    %508 = vmatprep.subr.mxu0 0.0
    %509 = vmatpush1.msra.mxu0 0.0
    %510 = vmatprep.subr.mxu0 0.0
    %511 = vmatpush1.msra.mxu0 0.0
    %512 = vmatprep.subr.mxu0 0.0
    %513 = vmatpush1.msra.mxu0 0.0
    %514 = vmatprep.subr.mxu0 0.0
    %515 = vmatpush1.msra.mxu0 0.0
    %516 = vmatprep.subr.mxu0 0.0
    %517 = vmatpush1.msra.mxu0 0.0
    %518 = vmatprep.mubr.f32.mxu0 0.0
    %519 = vmatmul.mubr.f32.gmra.mrb[0].mxu0 %v452
    %v520 = vpop.f32.mrb[0].mxu0
    %v521 = vadd.f32 0.0, %v520
    %v522 = vpop.f32.mrb[0].mxu0
    %523 = vdwg.mxu0
    %524 = vrot.lane.b32.xlu0 %v187, 120
    %v525 = vpop.permute.xlu0 %524
    %526 = vrot.lane.b32.xlu0 %v187, 88
    %v527 = vpop.permute.xlu0 %526
    %v528 = vsel %vm198, %v525, 0
    %v530 = vsel %vm198, %v527, 0
    %532 = vmatprep.subr.mxu0 0.0
    %533 = vmatpush1.xpose.msra.mxu0 %v530
    %534 = vmatprep.subr.mxu0 0.0
    %535 = vmatpush1.xpose.msra.mxu0 0.0
    %536 = vmatprep.subr.mxu0 0.0
    %537 = vmatpush1.xpose.msra.mxu0 0.0
    %538 = vmatprep.subr.mxu0 0.0
    %539 = vmatpush1.xpose.msra.mxu0 0.0
    %540 = vmatprep.subr.mxu0 0.0
    %541 = vmatpush1.xpose.msra.mxu0 0.0
    %542 = vmatprep.subr.mxu0 0.0
    %543 = vmatpush1.xpose.msra.mxu0 0.0
    %544 = vmatprep.subr.mxu0 0.0
    %545 = vmatpush1.xpose.msra.mxu0 0.0
    %546 = vmatprep.subr.mxu0 0.0
    %547 = vmatpush1.xpose.msra.mxu0 0.0
    %548 = vmatprep.subr.mxu0 0.0
    %549 = vmatpush1.xpose.msra.mxu0 0.0
    %550 = vmatprep.subr.mxu0 0.0
    %551 = vmatpush1.xpose.msra.mxu0 0.0
    %552 = vmatprep.subr.mxu0 0.0
    %553 = vmatpush1.xpose.msra.mxu0 0.0
    %554 = vmatprep.subr.mxu0 0.0
    %555 = vmatpush1.xpose.msra.mxu0 0.0
    %556 = vmatprep.subr.mxu0 0.0
    %557 = vmatpush1.xpose.msra.mxu0 0.0
    %558 = vmatprep.subr.mxu0 0.0
    %559 = vmatpush1.xpose.msra.mxu0 0.0
    %560 = vmatprep.subr.mxu0 0.0
    %561 = vmatpush1.xpose.msra.mxu0 0.0
    %562 = vmatprep.subr.mxu0 0.0
    %563 = vmatpush1.xpose.msra.mxu0 0.0
    %564 = vmatprep.subr.mxu0 0.0
    %565 = vmatpush1.xpose.msra.mxu0 0.0
    %566 = vmatprep.subr.mxu0 0.0
    %567 = vmatpush1.xpose.msra.mxu0 0.0
    %568 = vmatprep.subr.mxu0 0.0
    %569 = vmatpush1.xpose.msra.mxu0 0.0
    %570 = vmatprep.subr.mxu0 0.0
    %571 = vmatpush1.xpose.msra.mxu0 0.0
    %572 = vmatprep.subr.mxu0 0.0
    %573 = vmatpush1.xpose.msra.mxu0 0.0
    %574 = vmatprep.subr.mxu0 0.0
    %575 = vmatpush1.xpose.msra.mxu0 0.0
    %576 = vmatprep.subr.mxu0 0.0
    %577 = vmatpush1.xpose.msra.mxu0 0.0
    %578 = vmatprep.subr.mxu0 0.0
    %579 = vmatpush1.xpose.msra.mxu0 0.0
    %580 = vmatprep.subr.mxu0 0.0
    %581 = vmatpush1.xpose.msra.mxu0 0.0
    %582 = vmatprep.subr.mxu0 0.0
    %583 = vmatpush1.xpose.msra.mxu0 0.0
    %584 = vmatprep.subr.mxu0 0.0
    %585 = vmatpush1.xpose.msra.mxu0 0.0
    %586 = vmatprep.subr.mxu0 0.0
    %587 = vmatpush1.xpose.msra.mxu0 0.0
    %588 = vmatprep.subr.mxu0 0.0
    %589 = vmatpush1.xpose.msra.mxu0 0.0
    %590 = vmatprep.subr.mxu0 0.0
    %591 = vmatpush1.xpose.msra.mxu0 0.0
    %592 = vmatprep.subr.mxu0 0.0
    %593 = vmatpush1.xpose.msra.mxu0 0.0
    %594 = vmatprep.subr.mxu0 0.0
    %595 = vmatpush1.xpose.msra.mxu0 0.0
    %596 = vmatprep.mubr.f32.mxu0 0.0
    %597 = vmatmul.mubr.f32.gmra.mrb[0].mxu0 %v528
    %v598 = vpop.f32.mrb[0].mxu0
    %v599 = vadd.f32 0.0, %v598
    %v600 = vpop.f32.mrb[0].mxu0
    %601 = vdwg.mxu0
    %602 = vrot.lane.b32.xlu0 %v192, 120
    %v603 = vpop.permute.xlu0 %602
    %604 = vrot.lane.b32.xlu0 %v192, 88
    %v605 = vpop.permute.xlu0 %604
    %v606 = vsel %vm198, %v603, 0
    %v608 = vsel %vm198, %v605, 0
    %610 = vmatprep.subr.mxu0 0.0
    %611 = vmatpush1.xpose.msra.mxu0 %v608
    %612 = vmatprep.subr.mxu0 0.0
    %613 = vmatpush1.xpose.msra.mxu0 0.0
    %614 = vmatprep.subr.mxu0 0.0
    %615 = vmatpush1.xpose.msra.mxu0 0.0
    %616 = vmatprep.subr.mxu0 0.0
    %617 = vmatpush1.xpose.msra.mxu0 0.0
    %618 = vmatprep.subr.mxu0 0.0
    %619 = vmatpush1.xpose.msra.mxu0 0.0
    %620 = vmatprep.subr.mxu0 0.0
    %621 = vmatpush1.xpose.msra.mxu0 0.0
    %622 = vmatprep.subr.mxu0 0.0
    %623 = vmatpush1.xpose.msra.mxu0 0.0
    %624 = vmatprep.subr.mxu0 0.0
    %625 = vmatpush1.xpose.msra.mxu0 0.0
    %626 = vmatprep.subr.mxu0 0.0
    %627 = vmatpush1.xpose.msra.mxu0 0.0
    %628 = vmatprep.subr.mxu0 0.0
    %629 = vmatpush1.xpose.msra.mxu0 0.0
    %630 = vmatprep.subr.mxu0 0.0
    %631 = vmatpush1.xpose.msra.mxu0 0.0
    %632 = vmatprep.subr.mxu0 0.0
    %633 = vmatpush1.xpose.msra.mxu0 0.0
    %634 = vmatprep.subr.mxu0 0.0
    %635 = vmatpush1.xpose.msra.mxu0 0.0
    %636 = vmatprep.subr.mxu0 0.0
    %637 = vmatpush1.xpose.msra.mxu0 0.0
    %638 = vmatprep.subr.mxu0 0.0
    %639 = vmatpush1.xpose.msra.mxu0 0.0
    %640 = vmatprep.subr.mxu0 0.0
    %641 = vmatpush1.xpose.msra.mxu0 0.0
    %642 = vmatprep.subr.mxu0 0.0
    %643 = vmatpush1.xpose.msra.mxu0 0.0
    %644 = vmatprep.subr.mxu0 0.0
    %645 = vmatpush1.xpose.msra.mxu0 0.0
    %646 = vmatprep.subr.mxu0 0.0
    %647 = vmatpush1.xpose.msra.mxu0 0.0
    %648 = vmatprep.subr.mxu0 0.0
    %649 = vmatpush1.xpose.msra.mxu0 0.0
    %650 = vmatprep.subr.mxu0 0.0
    %651 = vmatpush1.xpose.msra.mxu0 0.0
    %652 = vmatprep.subr.mxu0 0.0
    %653 = vmatpush1.xpose.msra.mxu0 0.0
    %654 = vmatprep.subr.mxu0 0.0
    %655 = vmatpush1.xpose.msra.mxu0 0.0
    %656 = vmatprep.subr.mxu0 0.0
    %657 = vmatpush1.xpose.msra.mxu0 0.0
    %658 = vmatprep.subr.mxu0 0.0
    %659 = vmatpush1.xpose.msra.mxu0 0.0
    %660 = vmatprep.subr.mxu0 0.0
    %661 = vmatpush1.xpose.msra.mxu0 0.0
    %662 = vmatprep.subr.mxu0 0.0
    %663 = vmatpush1.xpose.msra.mxu0 0.0
    %664 = vmatprep.subr.mxu0 0.0
    %665 = vmatpush1.xpose.msra.mxu0 0.0
    %666 = vmatprep.subr.mxu0 0.0
    %667 = vmatpush1.xpose.msra.mxu0 0.0
    %668 = vmatprep.subr.mxu0 0.0
    %669 = vmatpush1.xpose.msra.mxu0 0.0
    %670 = vmatprep.subr.mxu0 0.0
    %671 = vmatpush1.xpose.msra.mxu0 0.0
    %672 = vmatprep.subr.mxu0 0.0
    %673 = vmatpush1.xpose.msra.mxu0 0.0
    %674 = vmatprep.mubr.f32.mxu0 0.0
    %675 = vmatmul.mubr.f32.gmra.mrb[0].mxu0 %v606
    %v676 = vpop.f32.mrb[0].mxu0
    %v677 = vadd.f32 0.0, %v676
    %v678 = vpop.f32.mrb[0].mxu0
    %679 = vdwg.mxu0
    %v680 = vsel %vm198, %v599, -inf
    %681 = vmax.xlane.f32.xlu0 %v680
    %v682 = vpop.xlane.xlu0 %681
    %v683 = vsel %vm198, %v677, -inf
    %684 = vmax.xlane.f32.xlu0 %v683
    %v685 = vpop.xlane.xlu0 %684
    %v686 = vsub.f32 %v599, %v682
    %v687 = vsub.f32 %v677, %v685
    %v688 = vmul.f32 %v686, 1.442695
    %v689 = vpow.pop %v688
    %v690 = vmul.f32 %v687, 1.442695
    %v691 = vpow.pop %v690
    %v692 = vsel %vm198, %v689, 0.0
    %693 = vadd.xlane.f32.xlu0 %v692
    %v694 = vpop.xlane.xlu0 %693
    %v695 = vsel %vm198, %v691, 0.0
    %696 = vadd.xlane.f32.xlu0 %v695
    %v697 = vpop.xlane.xlu0 %696
    %v698 = vrcp.pop %v694
    %v699 = vrcp.pop %v697
    %v700 = vmul.f32 %v689, %v698
    %v701 = vmul.f32 %v691, %v699
    %702 = vrot.lane.b32.xlu0 %v187, 56
    %v703 = vpop.permute.xlu0 %702
    %v706 = vsel %vm198, %v700, 0
    %708 = vmatprep.subr.mxu0 0.0
    %709 = vmatpush1.msra.mxu0 %v703
    %710 = vmatprep.subr.mxu0 0.0
    %711 = vmatpush1.msra.mxu0 0.0
    %712 = vmatprep.subr.mxu0 0.0
    %713 = vmatpush1.msra.mxu0 0.0
    %714 = vmatprep.subr.mxu0 0.0
    %715 = vmatpush1.msra.mxu0 0.0
    %716 = vmatprep.subr.mxu0 0.0
    %717 = vmatpush1.msra.mxu0 0.0
    %718 = vmatprep.subr.mxu0 0.0
    %719 = vmatpush1.msra.mxu0 0.0
    %720 = vmatprep.subr.mxu0 0.0
    %721 = vmatpush1.msra.mxu0 0.0
    %722 = vmatprep.subr.mxu0 0.0
    %723 = vmatpush1.msra.mxu0 0.0
    %724 = vmatprep.subr.mxu0 0.0
    %725 = vmatpush1.msra.mxu0 0.0
    %726 = vmatprep.subr.mxu0 0.0
    %727 = vmatpush1.msra.mxu0 0.0
    %728 = vmatprep.subr.mxu0 0.0
    %729 = vmatpush1.msra.mxu0 0.0
    %730 = vmatprep.subr.mxu0 0.0
    %731 = vmatpush1.msra.mxu0 0.0
    %732 = vmatprep.subr.mxu0 0.0
    %733 = vmatpush1.msra.mxu0 0.0
    %734 = vmatprep.subr.mxu0 0.0
    %735 = vmatpush1.msra.mxu0 0.0
    %736 = vmatprep.subr.mxu0 0.0
    %737 = vmatpush1.msra.mxu0 0.0
    %738 = vmatprep.subr.mxu0 0.0
    %739 = vmatpush1.msra.mxu0 0.0
    %740 = vmatprep.subr.mxu0 0.0
    %741 = vmatpush1.msra.mxu0 0.0
    %742 = vmatprep.subr.mxu0 0.0
    %743 = vmatpush1.msra.mxu0 0.0
    %744 = vmatprep.subr.mxu0 0.0
    %745 = vmatpush1.msra.mxu0 0.0
    %746 = vmatprep.subr.mxu0 0.0
    %747 = vmatpush1.msra.mxu0 0.0
    %748 = vmatprep.subr.mxu0 0.0
    %749 = vmatpush1.msra.mxu0 0.0
    %750 = vmatprep.subr.mxu0 0.0
    %751 = vmatpush1.msra.mxu0 0.0
    %752 = vmatprep.subr.mxu0 0.0
    %753 = vmatpush1.msra.mxu0 0.0
    %754 = vmatprep.subr.mxu0 0.0
    %755 = vmatpush1.msra.mxu0 0.0
    %756 = vmatprep.subr.mxu0 0.0
    %757 = vmatpush1.msra.mxu0 0.0
    %758 = vmatprep.subr.mxu0 0.0
    %759 = vmatpush1.msra.mxu0 0.0
    %760 = vmatprep.subr.mxu0 0.0
    %761 = vmatpush1.msra.mxu0 0.0
    %762 = vmatprep.subr.mxu0 0.0
    %763 = vmatpush1.msra.mxu0 0.0
    %764 = vmatprep.subr.mxu0 0.0
    %765 = vmatpush1.msra.mxu0 0.0
    %766 = vmatprep.subr.mxu0 0.0
    %767 = vmatpush1.msra.mxu0 0.0
    %768 = vmatprep.subr.mxu0 0.0
    %769 = vmatpush1.msra.mxu0 0.0
    %770 = vmatprep.subr.mxu0 0.0
    %771 = vmatpush1.msra.mxu0 0.0
    %772 = vmatprep.mubr.f32.mxu0 0.0
    %773 = vmatmul.mubr.f32.gmra.mrb[0].mxu0 %v706
    %v774 = vpop.f32.mrb[0].mxu0
    %v775 = vadd.f32 0.0, %v774
    %v776 = vpop.f32.mrb[0].mxu0
    %777 = vdwg.mxu0
    %778 = vrot.lane.b32.xlu0 %v192, 56
    %v779 = vpop.permute.xlu0 %778
    %v782 = vsel %vm198, %v701, 0
    %784 = vmatprep.subr.mxu0 0.0
    %785 = vmatpush1.msra.mxu0 %v779
    %786 = vmatprep.subr.mxu0 0.0
    %787 = vmatpush1.msra.mxu0 0.0
    %788 = vmatprep.subr.mxu0 0.0
    %789 = vmatpush1.msra.mxu0 0.0
    %790 = vmatprep.subr.mxu0 0.0
    %791 = vmatpush1.msra.mxu0 0.0
    %792 = vmatprep.subr.mxu0 0.0
    %793 = vmatpush1.msra.mxu0 0.0
    %794 = vmatprep.subr.mxu0 0.0
    %795 = vmatpush1.msra.mxu0 0.0
    %796 = vmatprep.subr.mxu0 0.0
    %797 = vmatpush1.msra.mxu0 0.0
    %798 = vmatprep.subr.mxu0 0.0
    %799 = vmatpush1.msra.mxu0 0.0
    %800 = vmatprep.subr.mxu0 0.0
    %801 = vmatpush1.msra.mxu0 0.0
    %802 = vmatprep.subr.mxu0 0.0
    %803 = vmatpush1.msra.mxu0 0.0
    %804 = vmatprep.subr.mxu0 0.0
    %805 = vmatpush1.msra.mxu0 0.0
    %806 = vmatprep.subr.mxu0 0.0
    %807 = vmatpush1.msra.mxu0 0.0
    %808 = vmatprep.subr.mxu0 0.0
    %809 = vmatpush1.msra.mxu0 0.0
    %810 = vmatprep.subr.mxu0 0.0
    %811 = vmatpush1.msra.mxu0 0.0
    %812 = vmatprep.subr.mxu0 0.0
    %813 = vmatpush1.msra.mxu0 0.0
    %814 = vmatprep.subr.mxu0 0.0
    %815 = vmatpush1.msra.mxu0 0.0
    %816 = vmatprep.subr.mxu0 0.0
    %817 = vmatpush1.msra.mxu0 0.0
    %818 = vmatprep.subr.mxu0 0.0
    %819 = vmatpush1.msra.mxu0 0.0
    %820 = vmatprep.subr.mxu0 0.0
    %821 = vmatpush1.msra.mxu0 0.0
    %822 = vmatprep.subr.mxu0 0.0
    %823 = vmatpush1.msra.mxu0 0.0
    %824 = vmatprep.subr.mxu0 0.0
    %825 = vmatpush1.msra.mxu0 0.0
    %826 = vmatprep.subr.mxu0 0.0
    %827 = vmatpush1.msra.mxu0 0.0
    %828 = vmatprep.subr.mxu0 0.0
    %829 = vmatpush1.msra.mxu0 0.0
    %830 = vmatprep.subr.mxu0 0.0
    %831 = vmatpush1.msra.mxu0 0.0
    %832 = vmatprep.subr.mxu0 0.0
    %833 = vmatpush1.msra.mxu0 0.0
    %834 = vmatprep.subr.mxu0 0.0
    %835 = vmatpush1.msra.mxu0 0.0
    %836 = vmatprep.subr.mxu0 0.0
    %837 = vmatpush1.msra.mxu0 0.0
    %838 = vmatprep.subr.mxu0 0.0
    %839 = vmatpush1.msra.mxu0 0.0
    %840 = vmatprep.subr.mxu0 0.0
    %841 = vmatpush1.msra.mxu0 0.0
    %842 = vmatprep.subr.mxu0 0.0
    %843 = vmatpush1.msra.mxu0 0.0
    %844 = vmatprep.subr.mxu0 0.0
    %845 = vmatpush1.msra.mxu0 0.0
    %846 = vmatprep.subr.mxu0 0.0
    %847 = vmatpush1.msra.mxu0 0.0
    %848 = vmatprep.mubr.f32.mxu0 0.0
    %849 = vmatmul.mubr.f32.gmra.mrb[0].mxu0 %v782
    %v850 = vpop.f32.mrb[0].mxu0
    %v851 = vadd.f32 0.0, %v850
    %v852 = vpop.f32.mrb[0].mxu0
    %853 = vdwg.mxu0
    %854 = vrot.lane.b32.xlu0 %v187, 112
    %v855 = vpop.permute.xlu0 %854
    %856 = vrot.lane.b32.xlu0 %v187, 80
    %v857 = vpop.permute.xlu0 %856
    %v858 = vsel %vm198, %v855, 0
    %v860 = vsel %vm198, %v857, 0
    %862 = vmatprep.subr.mxu0 0.0
    %863 = vmatpush1.xpose.msra.mxu0 %v860
    %864 = vmatprep.subr.mxu0 0.0
    %865 = vmatpush1.xpose.msra.mxu0 0.0
    %866 = vmatprep.subr.mxu0 0.0
    %867 = vmatpush1.xpose.msra.mxu0 0.0
    %868 = vmatprep.subr.mxu0 0.0
    %869 = vmatpush1.xpose.msra.mxu0 0.0
    %870 = vmatprep.subr.mxu0 0.0
    %871 = vmatpush1.xpose.msra.mxu0 0.0
    %872 = vmatprep.subr.mxu0 0.0
    %873 = vmatpush1.xpose.msra.mxu0 0.0
    %874 = vmatprep.subr.mxu0 0.0
    %875 = vmatpush1.xpose.msra.mxu0 0.0
    %876 = vmatprep.subr.mxu0 0.0
    %877 = vmatpush1.xpose.msra.mxu0 0.0
    %878 = vmatprep.subr.mxu0 0.0
    %879 = vmatpush1.xpose.msra.mxu0 0.0
    %880 = vmatprep.subr.mxu0 0.0
    %881 = vmatpush1.xpose.msra.mxu0 0.0
    %882 = vmatprep.subr.mxu0 0.0
    %883 = vmatpush1.xpose.msra.mxu0 0.0
    %884 = vmatprep.subr.mxu0 0.0
    %885 = vmatpush1.xpose.msra.mxu0 0.0
    %886 = vmatprep.subr.mxu0 0.0
    %887 = vmatpush1.xpose.msra.mxu0 0.0
    %888 = vmatprep.subr.mxu0 0.0
    %889 = vmatpush1.xpose.msra.mxu0 0.0
    %890 = vmatprep.subr.mxu0 0.0
    %891 = vmatpush1.xpose.msra.mxu0 0.0
    %892 = vmatprep.subr.mxu0 0.0
    %893 = vmatpush1.xpose.msra.mxu0 0.0
    %894 = vmatprep.subr.mxu0 0.0
    %895 = vmatpush1.xpose.msra.mxu0 0.0
    %896 = vmatprep.subr.mxu0 0.0
    %897 = vmatpush1.xpose.msra.mxu0 0.0
    %898 = vmatprep.subr.mxu0 0.0
    %899 = vmatpush1.xpose.msra.mxu0 0.0
    %900 = vmatprep.subr.mxu0 0.0
    %901 = vmatpush1.xpose.msra.mxu0 0.0
    %902 = vmatprep.subr.mxu0 0.0
    %903 = vmatpush1.xpose.msra.mxu0 0.0
    %904 = vmatprep.subr.mxu0 0.0
    %905 = vmatpush1.xpose.msra.mxu0 0.0
    %906 = vmatprep.subr.mxu0 0.0
    %907 = vmatpush1.xpose.msra.mxu0 0.0
    %908 = vmatprep.subr.mxu0 0.0
    %909 = vmatpush1.xpose.msra.mxu0 0.0
    %910 = vmatprep.subr.mxu0 0.0
    %911 = vmatpush1.xpose.msra.mxu0 0.0
    %912 = vmatprep.subr.mxu0 0.0
    %913 = vmatpush1.xpose.msra.mxu0 0.0
    %914 = vmatprep.subr.mxu0 0.0
    %915 = vmatpush1.xpose.msra.mxu0 0.0
    %916 = vmatprep.subr.mxu0 0.0
    %917 = vmatpush1.xpose.msra.mxu0 0.0
    %918 = vmatprep.subr.mxu0 0.0
    %919 = vmatpush1.xpose.msra.mxu0 0.0
    %920 = vmatprep.subr.mxu0 0.0
    %921 = vmatpush1.xpose.msra.mxu0 0.0
    %922 = vmatprep.subr.mxu0 0.0
    %923 = vmatpush1.xpose.msra.mxu0 0.0
    %924 = vmatprep.subr.mxu0 0.0
    %925 = vmatpush1.xpose.msra.mxu0 0.0
    %926 = vmatprep.mubr.f32.mxu0 0.0
    %927 = vmatmul.mubr.f32.gmra.mrb[0].mxu0 %v858
    %v928 = vpop.f32.mrb[0].mxu0
    %v929 = vadd.f32 0.0, %v928
    %v930 = vpop.f32.mrb[0].mxu0
    %931 = vdwg.mxu0
    %932 = vrot.lane.b32.xlu0 %v192, 112
    %v933 = vpop.permute.xlu0 %932
    %934 = vrot.lane.b32.xlu0 %v192, 80
    %v935 = vpop.permute.xlu0 %934
    %v936 = vsel %vm198, %v933, 0
    %v938 = vsel %vm198, %v935, 0
    %940 = vmatprep.subr.mxu0 0.0
    %941 = vmatpush1.xpose.msra.mxu0 %v938
    %942 = vmatprep.subr.mxu0 0.0
    %943 = vmatpush1.xpose.msra.mxu0 0.0
    %944 = vmatprep.subr.mxu0 0.0
    %945 = vmatpush1.xpose.msra.mxu0 0.0
    %946 = vmatprep.subr.mxu0 0.0
    %947 = vmatpush1.xpose.msra.mxu0 0.0
    %948 = vmatprep.subr.mxu0 0.0
    %949 = vmatpush1.xpose.msra.mxu0 0.0
    %950 = vmatprep.subr.mxu0 0.0
    %951 = vmatpush1.xpose.msra.mxu0 0.0
    %952 = vmatprep.subr.mxu0 0.0
    %953 = vmatpush1.xpose.msra.mxu0 0.0
    %954 = vmatprep.subr.mxu0 0.0
    %955 = vmatpush1.xpose.msra.mxu0 0.0
    %956 = vmatprep.subr.mxu0 0.0
    %957 = vmatpush1.xpose.msra.mxu0 0.0
    %958 = vmatprep.subr.mxu0 0.0
    %959 = vmatpush1.xpose.msra.mxu0 0.0
    %960 = vmatprep.subr.mxu0 0.0
    %961 = vmatpush1.xpose.msra.mxu0 0.0
    %962 = vmatprep.subr.mxu0 0.0
    %963 = vmatpush1.xpose.msra.mxu0 0.0
    %964 = vmatprep.subr.mxu0 0.0
    %965 = vmatpush1.xpose.msra.mxu0 0.0
    %966 = vmatprep.subr.mxu0 0.0
    %967 = vmatpush1.xpose.msra.mxu0 0.0
    %968 = vmatprep.subr.mxu0 0.0
    %969 = vmatpush1.xpose.msra.mxu0 0.0
    %970 = vmatprep.subr.mxu0 0.0
    %971 = vmatpush1.xpose.msra.mxu0 0.0
    %972 = vmatprep.subr.mxu0 0.0
    %973 = vmatpush1.xpose.msra.mxu0 0.0
    %974 = vmatprep.subr.mxu0 0.0
    %975 = vmatpush1.xpose.msra.mxu0 0.0
    %976 = vmatprep.subr.mxu0 0.0
    %977 = vmatpush1.xpose.msra.mxu0 0.0
    %978 = vmatprep.subr.mxu0 0.0
    %979 = vmatpush1.xpose.msra.mxu0 0.0
    %980 = vmatprep.subr.mxu0 0.0
    %981 = vmatpush1.xpose.msra.mxu0 0.0
    %982 = vmatprep.subr.mxu0 0.0
    %983 = vmatpush1.xpose.msra.mxu0 0.0
    %984 = vmatprep.subr.mxu0 0.0
    %985 = vmatpush1.xpose.msra.mxu0 0.0
    %986 = vmatprep.subr.mxu0 0.0
    %987 = vmatpush1.xpose.msra.mxu0 0.0
    %988 = vmatprep.subr.mxu0 0.0
    %989 = vmatpush1.xpose.msra.mxu0 0.0
    %990 = vmatprep.subr.mxu0 0.0
    %991 = vmatpush1.xpose.msra.mxu0 0.0
    %992 = vmatprep.subr.mxu0 0.0
    %993 = vmatpush1.xpose.msra.mxu0 0.0
    %994 = vmatprep.subr.mxu0 0.0
    %995 = vmatpush1.xpose.msra.mxu0 0.0
    %996 = vmatprep.subr.mxu0 0.0
    %997 = vmatpush1.xpose.msra.mxu0 0.0
    %998 = vmatprep.subr.mxu0 0.0
    %999 = vmatpush1.xpose.msra.mxu0 0.0
    %1000 = vmatprep.subr.mxu0 0.0
    %1001 = vmatpush1.xpose.msra.mxu0 0.0
    %1002 = vmatprep.subr.mxu0 0.0
    %1003 = vmatpush1.xpose.msra.mxu0 0.0
    %1004 = vmatprep.mubr.f32.mxu0 0.0
    %1005 = vmatmul.mubr.f32.gmra.mrb[0].mxu0 %v936
    %v1006 = vpop.f32.mrb[0].mxu0
    %v1007 = vadd.f32 0.0, %v1006
    %v1008 = vpop.f32.mrb[0].mxu0
    %1009 = vdwg.mxu0
    %v1010 = vsel %vm198, %v929, -inf
    %1011 = vmax.xlane.f32.xlu0 %v1010
    %v1012 = vpop.xlane.xlu0 %1011
    %v1013 = vsel %vm198, %v1007, -inf
    %1014 = vmax.xlane.f32.xlu0 %v1013
    %v1015 = vpop.xlane.xlu0 %1014
    %v1016 = vsub.f32 %v929, %v1012
    %v1017 = vsub.f32 %v1007, %v1015
    %v1018 = vmul.f32 %v1016, 1.442695
    %v1019 = vpow.pop %v1018
    %v1020 = vmul.f32 %v1017, 1.442695
    %v1021 = vpow.pop %v1020
    %v1022 = vsel %vm198, %v1019, 0.0
    %1023 = vadd.xlane.f32.xlu0 %v1022
    %v1024 = vpop.xlane.xlu0 %1023
    %v1025 = vsel %vm198, %v1021, 0.0
    %1026 = vadd.xlane.f32.xlu0 %v1025
    %v1027 = vpop.xlane.xlu0 %1026
    %v1028 = vrcp.pop %v1024
    %v1029 = vrcp.pop %v1027
    %v1030 = vmul.f32 %v1019, %v1028
    %v1031 = vmul.f32 %v1021, %v1029
    %1032 = vrot.lane.b32.xlu0 %v187, 48
    %v1033 = vpop.permute.xlu0 %1032
    %v1036 = vsel %vm198, %v1030, 0
    %1038 = vmatprep.subr.mxu0 0.0
    %1039 = vmatpush1.msra.mxu0 %v1033
    %1040 = vmatprep.subr.mxu0 0.0
    %1041 = vmatpush1.msra.mxu0 0.0
    %1042 = vmatprep.subr.mxu0 0.0
    %1043 = vmatpush1.msra.mxu0 0.0
    %1044 = vmatprep.subr.mxu0 0.0
    %1045 = vmatpush1.msra.mxu0 0.0
    %1046 = vmatprep.subr.mxu0 0.0
    %1047 = vmatpush1.msra.mxu0 0.0
    %1048 = vmatprep.subr.mxu0 0.0
    %1049 = vmatpush1.msra.mxu0 0.0
    %1050 = vmatprep.subr.mxu0 0.0
    %1051 = vmatpush1.msra.mxu0 0.0
    %1052 = vmatprep.subr.mxu0 0.0
    %1053 = vmatpush1.msra.mxu0 0.0
    %1054 = vmatprep.subr.mxu0 0.0
    %1055 = vmatpush1.msra.mxu0 0.0
    %1056 = vmatprep.subr.mxu0 0.0
    %1057 = vmatpush1.msra.mxu0 0.0
    %1058 = vmatprep.subr.mxu0 0.0
    %1059 = vmatpush1.msra.mxu0 0.0
    %1060 = vmatprep.subr.mxu0 0.0
    %1061 = vmatpush1.msra.mxu0 0.0
    %1062 = vmatprep.subr.mxu0 0.0
    %1063 = vmatpush1.msra.mxu0 0.0
    %1064 = vmatprep.subr.mxu0 0.0
    %1065 = vmatpush1.msra.mxu0 0.0
    %1066 = vmatprep.subr.mxu0 0.0
    %1067 = vmatpush1.msra.mxu0 0.0
    %1068 = vmatprep.subr.mxu0 0.0
    %1069 = vmatpush1.msra.mxu0 0.0
    %1070 = vmatprep.subr.mxu0 0.0
    %1071 = vmatpush1.msra.mxu0 0.0
    %1072 = vmatprep.subr.mxu0 0.0
    %1073 = vmatpush1.msra.mxu0 0.0
    %1074 = vmatprep.subr.mxu0 0.0
    %1075 = vmatpush1.msra.mxu0 0.0
    %1076 = vmatprep.subr.mxu0 0.0
    %1077 = vmatpush1.msra.mxu0 0.0
    %1078 = vmatprep.subr.mxu0 0.0
    %1079 = vmatpush1.msra.mxu0 0.0
    %1080 = vmatprep.subr.mxu0 0.0
    %1081 = vmatpush1.msra.mxu0 0.0
    %1082 = vmatprep.subr.mxu0 0.0
    %1083 = vmatpush1.msra.mxu0 0.0
    %1084 = vmatprep.subr.mxu0 0.0
    %1085 = vmatpush1.msra.mxu0 0.0
    %1086 = vmatprep.subr.mxu0 0.0
    %1087 = vmatpush1.msra.mxu0 0.0
    %1088 = vmatprep.subr.mxu0 0.0
    %1089 = vmatpush1.msra.mxu0 0.0
    %1090 = vmatprep.subr.mxu0 0.0
    %1091 = vmatpush1.msra.mxu0 0.0
    %1092 = vmatprep.subr.mxu0 0.0
    %1093 = vmatpush1.msra.mxu0 0.0
    %1094 = vmatprep.subr.mxu0 0.0
    %1095 = vmatpush1.msra.mxu0 0.0
    %1096 = vmatprep.subr.mxu0 0.0
    %1097 = vmatpush1.msra.mxu0 0.0
    %1098 = vmatprep.subr.mxu0 0.0
    %1099 = vmatpush1.msra.mxu0 0.0
    %1100 = vmatprep.subr.mxu0 0.0
    %1101 = vmatpush1.msra.mxu0 0.0
    %1102 = vmatprep.mubr.f32.mxu0 0.0
    %1103 = vmatmul.mubr.f32.gmra.mrb[0].mxu0 %v1036
    %v1104 = vpop.f32.mrb[0].mxu0
    %v1105 = vadd.f32 0.0, %v1104
    %v1106 = vpop.f32.mrb[0].mxu0
    %1107 = vdwg.mxu0
    %1108 = vrot.lane.b32.xlu0 %v192, 48
    %v1109 = vpop.permute.xlu0 %1108
    %v1112 = vsel %vm198, %v1031, 0
    %1114 = vmatprep.subr.mxu0 0.0
    %1115 = vmatpush1.msra.mxu0 %v1109
    %1116 = vmatprep.subr.mxu0 0.0
    %1117 = vmatpush1.msra.mxu0 0.0
    %1118 = vmatprep.subr.mxu0 0.0
    %1119 = vmatpush1.msra.mxu0 0.0
    %1120 = vmatprep.subr.mxu0 0.0
    %1121 = vmatpush1.msra.mxu0 0.0
    %1122 = vmatprep.subr.mxu0 0.0
    %1123 = vmatpush1.msra.mxu0 0.0
    %1124 = vmatprep.subr.mxu0 0.0
    %1125 = vmatpush1.msra.mxu0 0.0
    %1126 = vmatprep.subr.mxu0 0.0
    %1127 = vmatpush1.msra.mxu0 0.0
    %1128 = vmatprep.subr.mxu0 0.0
    %1129 = vmatpush1.msra.mxu0 0.0
    %1130 = vmatprep.subr.mxu0 0.0
    %1131 = vmatpush1.msra.mxu0 0.0
    %1132 = vmatprep.subr.mxu0 0.0
    %1133 = vmatpush1.msra.mxu0 0.0
    %1134 = vmatprep.subr.mxu0 0.0
    %1135 = vmatpush1.msra.mxu0 0.0
    %1136 = vmatprep.subr.mxu0 0.0
    %1137 = vmatpush1.msra.mxu0 0.0
    %1138 = vmatprep.subr.mxu0 0.0
    %1139 = vmatpush1.msra.mxu0 0.0
    %1140 = vmatprep.subr.mxu0 0.0
    %1141 = vmatpush1.msra.mxu0 0.0
    %1142 = vmatprep.subr.mxu0 0.0
    %1143 = vmatpush1.msra.mxu0 0.0
    %1144 = vmatprep.subr.mxu0 0.0
    %1145 = vmatpush1.msra.mxu0 0.0
    %1146 = vmatprep.subr.mxu0 0.0
    %1147 = vmatpush1.msra.mxu0 0.0
    %1148 = vmatprep.subr.mxu0 0.0
    %1149 = vmatpush1.msra.mxu0 0.0
    %1150 = vmatprep.subr.mxu0 0.0
    %1151 = vmatpush1.msra.mxu0 0.0
    %1152 = vmatprep.subr.mxu0 0.0
    %1153 = vmatpush1.msra.mxu0 0.0
    %1154 = vmatprep.subr.mxu0 0.0
    %1155 = vmatpush1.msra.mxu0 0.0
    %1156 = vmatprep.subr.mxu0 0.0
    %1157 = vmatpush1.msra.mxu0 0.0
    %1158 = vmatprep.subr.mxu0 0.0
    %1159 = vmatpush1.msra.mxu0 0.0
    %1160 = vmatprep.subr.mxu0 0.0
    %1161 = vmatpush1.msra.mxu0 0.0
    %1162 = vmatprep.subr.mxu0 0.0
    %1163 = vmatpush1.msra.mxu0 0.0
    %1164 = vmatprep.subr.mxu0 0.0
    %1165 = vmatpush1.msra.mxu0 0.0
    %1166 = vmatprep.subr.mxu0 0.0
    %1167 = vmatpush1.msra.mxu0 0.0
    %1168 = vmatprep.subr.mxu0 0.0
    %1169 = vmatpush1.msra.mxu0 0.0
    %1170 = vmatprep.subr.mxu0 0.0
    %1171 = vmatpush1.msra.mxu0 0.0
    %1172 = vmatprep.subr.mxu0 0.0
    %1173 = vmatpush1.msra.mxu0 0.0
    %1174 = vmatprep.subr.mxu0 0.0
    %1175 = vmatpush1.msra.mxu0 0.0
    %1176 = vmatprep.subr.mxu0 0.0
    %1177 = vmatpush1.msra.mxu0 0.0
    %1178 = vmatprep.mubr.f32.mxu0 0.0
    %1179 = vmatmul.mubr.f32.gmra.mrb[0].mxu0 %v1112
    %v1180 = vpop.f32.mrb[0].mxu0
    %v1181 = vadd.f32 0.0, %v1180
    %v1182 = vpop.f32.mrb[0].mxu0
    %1183 = vdwg.mxu0
    %1184 = vrot.lane.b32.xlu0 %v187, 104
    %v1185 = vpop.permute.xlu0 %1184
    %1186 = vrot.lane.b32.xlu0 %v187, 72
    %v1187 = vpop.permute.xlu0 %1186
    %v1188 = vsel %vm198, %v1185, 0
    %v1190 = vsel %vm198, %v1187, 0
    %1192 = vmatprep.subr.mxu0 0.0
    %1193 = vmatpush1.xpose.msra.mxu0 %v1190
    %1194 = vmatprep.subr.mxu0 0.0
    %1195 = vmatpush1.xpose.msra.mxu0 0.0
    %1196 = vmatprep.subr.mxu0 0.0
    %1197 = vmatpush1.xpose.msra.mxu0 0.0
    %1198 = vmatprep.subr.mxu0 0.0
    %1199 = vmatpush1.xpose.msra.mxu0 0.0
    %1200 = vmatprep.subr.mxu0 0.0
    %1201 = vmatpush1.xpose.msra.mxu0 0.0
    %1202 = vmatprep.subr.mxu0 0.0
    %1203 = vmatpush1.xpose.msra.mxu0 0.0
    %1204 = vmatprep.subr.mxu0 0.0
    %1205 = vmatpush1.xpose.msra.mxu0 0.0
    %1206 = vmatprep.subr.mxu0 0.0
    %1207 = vmatpush1.xpose.msra.mxu0 0.0
    %1208 = vmatprep.subr.mxu0 0.0
    %1209 = vmatpush1.xpose.msra.mxu0 0.0
    %1210 = vmatprep.subr.mxu0 0.0
    %1211 = vmatpush1.xpose.msra.mxu0 0.0
    %1212 = vmatprep.subr.mxu0 0.0
    %1213 = vmatpush1.xpose.msra.mxu0 0.0
    %1214 = vmatprep.subr.mxu0 0.0
    %1215 = vmatpush1.xpose.msra.mxu0 0.0
    %1216 = vmatprep.subr.mxu0 0.0
    %1217 = vmatpush1.xpose.msra.mxu0 0.0
    %1218 = vmatprep.subr.mxu0 0.0
    %1219 = vmatpush1.xpose.msra.mxu0 0.0
    %1220 = vmatprep.subr.mxu0 0.0
    %1221 = vmatpush1.xpose.msra.mxu0 0.0
    %1222 = vmatprep.subr.mxu0 0.0
    %1223 = vmatpush1.xpose.msra.mxu0 0.0
    %1224 = vmatprep.subr.mxu0 0.0
    %1225 = vmatpush1.xpose.msra.mxu0 0.0
    %1226 = vmatprep.subr.mxu0 0.0
    %1227 = vmatpush1.xpose.msra.mxu0 0.0
    %1228 = vmatprep.subr.mxu0 0.0
    %1229 = vmatpush1.xpose.msra.mxu0 0.0
    %1230 = vmatprep.subr.mxu0 0.0
    %1231 = vmatpush1.xpose.msra.mxu0 0.0
    %1232 = vmatprep.subr.mxu0 0.0
    %1233 = vmatpush1.xpose.msra.mxu0 0.0
    %1234 = vmatprep.subr.mxu0 0.0
    %1235 = vmatpush1.xpose.msra.mxu0 0.0
    %1236 = vmatprep.subr.mxu0 0.0
    %1237 = vmatpush1.xpose.msra.mxu0 0.0
    %1238 = vmatprep.subr.mxu0 0.0
    %1239 = vmatpush1.xpose.msra.mxu0 0.0
    %1240 = vmatprep.subr.mxu0 0.0
    %1241 = vmatpush1.xpose.msra.mxu0 0.0
    %1242 = vmatprep.subr.mxu0 0.0
    %1243 = vmatpush1.xpose.msra.mxu0 0.0
    %1244 = vmatprep.subr.mxu0 0.0
    %1245 = vmatpush1.xpose.msra.mxu0 0.0
    %1246 = vmatprep.subr.mxu0 0.0
    %1247 = vmatpush1.xpose.msra.mxu0 0.0
    %1248 = vmatprep.subr.mxu0 0.0
    %1249 = vmatpush1.xpose.msra.mxu0 0.0
    %1250 = vmatprep.subr.mxu0 0.0
    %1251 = vmatpush1.xpose.msra.mxu0 0.0
    %1252 = vmatprep.subr.mxu0 0.0
    %1253 = vmatpush1.xpose.msra.mxu0 0.0
    %1254 = vmatprep.subr.mxu0 0.0
    %1255 = vmatpush1.xpose.msra.mxu0 0.0
    %1256 = vmatprep.mubr.f32.mxu0 0.0
    %1257 = vmatmul.mubr.f32.gmra.mrb[0].mxu0 %v1188
    %v1258 = vpop.f32.mrb[0].mxu0
    %v1259 = vadd.f32 0.0, %v1258
    %v1260 = vpop.f32.mrb[0].mxu0
    %1261 = vdwg.mxu0
    %1262 = vrot.lane.b32.xlu0 %v192, 104
    %v1263 = vpop.permute.xlu0 %1262
    %1264 = vrot.lane.b32.xlu0 %v192, 72
    %v1265 = vpop.permute.xlu0 %1264
    %v1266 = vsel %vm198, %v1263, 0
    %v1268 = vsel %vm198, %v1265, 0
    %1270 = vmatprep.subr.mxu0 0.0
    %1271 = vmatpush1.xpose.msra.mxu0 %v1268
    %1272 = vmatprep.subr.mxu0 0.0
    %1273 = vmatpush1.xpose.msra.mxu0 0.0
    %1274 = vmatprep.subr.mxu0 0.0
    %1275 = vmatpush1.xpose.msra.mxu0 0.0
    %1276 = vmatprep.subr.mxu0 0.0
    %1277 = vmatpush1.xpose.msra.mxu0 0.0
    %1278 = vmatprep.subr.mxu0 0.0
    %1279 = vmatpush1.xpose.msra.mxu0 0.0
    %1280 = vmatprep.subr.mxu0 0.0
    %1281 = vmatpush1.xpose.msra.mxu0 0.0
    %1282 = vmatprep.subr.mxu0 0.0
    %1283 = vmatpush1.xpose.msra.mxu0 0.0
    %1284 = vmatprep.subr.mxu0 0.0
    %1285 = vmatpush1.xpose.msra.mxu0 0.0
    %1286 = vmatprep.subr.mxu0 0.0
    %1287 = vmatpush1.xpose.msra.mxu0 0.0
    %1288 = vmatprep.subr.mxu0 0.0
    %1289 = vmatpush1.xpose.msra.mxu0 0.0
    %1290 = vmatprep.subr.mxu0 0.0
    %1291 = vmatpush1.xpose.msra.mxu0 0.0
    %1292 = vmatprep.subr.mxu0 0.0
    %1293 = vmatpush1.xpose.msra.mxu0 0.0
    %1294 = vmatprep.subr.mxu0 0.0
    %1295 = vmatpush1.xpose.msra.mxu0 0.0
    %1296 = vmatprep.subr.mxu0 0.0
    %1297 = vmatpush1.xpose.msra.mxu0 0.0
    %1298 = vmatprep.subr.mxu0 0.0
    %1299 = vmatpush1.xpose.msra.mxu0 0.0
    %1300 = vmatprep.subr.mxu0 0.0
    %1301 = vmatpush1.xpose.msra.mxu0 0.0
    %1302 = vmatprep.subr.mxu0 0.0
    %1303 = vmatpush1.xpose.msra.mxu0 0.0
    %1304 = vmatprep.subr.mxu0 0.0
    %1305 = vmatpush1.xpose.msra.mxu0 0.0
    %1306 = vmatprep.subr.mxu0 0.0
    %1307 = vmatpush1.xpose.msra.mxu0 0.0
    %1308 = vmatprep.subr.mxu0 0.0
    %1309 = vmatpush1.xpose.msra.mxu0 0.0
    %1310 = vmatprep.subr.mxu0 0.0
    %1311 = vmatpush1.xpose.msra.mxu0 0.0
    %1312 = vmatprep.subr.mxu0 0.0
    %1313 = vmatpush1.xpose.msra.mxu0 0.0
    %1314 = vmatprep.subr.mxu0 0.0
    %1315 = vmatpush1.xpose.msra.mxu0 0.0
    %1316 = vmatprep.subr.mxu0 0.0
    %1317 = vmatpush1.xpose.msra.mxu0 0.0
    %1318 = vmatprep.subr.mxu0 0.0
    %1319 = vmatpush1.xpose.msra.mxu0 0.0
    %1320 = vmatprep.subr.mxu0 0.0
    %1321 = vmatpush1.xpose.msra.mxu0 0.0
    %1322 = vmatprep.subr.mxu0 0.0
    %1323 = vmatpush1.xpose.msra.mxu0 0.0
    %1324 = vmatprep.subr.mxu0 0.0
    %1325 = vmatpush1.xpose.msra.mxu0 0.0
    %1326 = vmatprep.subr.mxu0 0.0
    %1327 = vmatpush1.xpose.msra.mxu0 0.0
    %1328 = vmatprep.subr.mxu0 0.0
    %1329 = vmatpush1.xpose.msra.mxu0 0.0
    %1330 = vmatprep.subr.mxu0 0.0
    %1331 = vmatpush1.xpose.msra.mxu0 0.0
    %1332 = vmatprep.subr.mxu0 0.0
    %1333 = vmatpush1.xpose.msra.mxu0 0.0
    %1334 = vmatprep.mubr.f32.mxu0 0.0
    %1335 = vmatmul.mubr.f32.gmra.mrb[0].mxu0 %v1266
    %v1336 = vpop.f32.mrb[0].mxu0
    %v1337 = vadd.f32 0.0, %v1336
    %v1338 = vpop.f32.mrb[0].mxu0
    %1339 = vdwg.mxu0
    %v1340 = vsel %vm198, %v1259, -inf
    %1341 = vmax.xlane.f32.xlu0 %v1340
    %v1342 = vpop.xlane.xlu0 %1341
    %v1343 = vsel %vm198, %v1337, -inf
    %1344 = vmax.xlane.f32.xlu0 %v1343
    %v1345 = vpop.xlane.xlu0 %1344
    %v1346 = vsub.f32 %v1259, %v1342
    %v1347 = vsub.f32 %v1337, %v1345
    %v1348 = vmul.f32 %v1346, 1.442695
    %v1349 = vpow.pop %v1348
    %v1350 = vmul.f32 %v1347, 1.442695
    %v1351 = vpow.pop %v1350
    %v1352 = vsel %vm198, %v1349, 0.0
    %1353 = vadd.xlane.f32.xlu0 %v1352
    %v1354 = vpop.xlane.xlu0 %1353
    %v1355 = vsel %vm198, %v1351, 0.0
    %1356 = vadd.xlane.f32.xlu0 %v1355
    %v1357 = vpop.xlane.xlu0 %1356
    %v1358 = vrcp.pop %v1354
    %v1359 = vrcp.pop %v1357
    %v1360 = vmul.f32 %v1349, %v1358
    %v1361 = vmul.f32 %v1351, %v1359
    %1362 = vrot.lane.b32.xlu0 %v187, 40
    %v1363 = vpop.permute.xlu0 %1362
    %v1366 = vsel %vm198, %v1360, 0
    %1368 = vmatprep.subr.mxu0 0.0
    %1369 = vmatpush1.msra.mxu0 %v1363
    %1370 = vmatprep.subr.mxu0 0.0
    %1371 = vmatpush1.msra.mxu0 0.0
    %1372 = vmatprep.subr.mxu0 0.0
    %1373 = vmatpush1.msra.mxu0 0.0
    %1374 = vmatprep.subr.mxu0 0.0
    %1375 = vmatpush1.msra.mxu0 0.0
    %1376 = vmatprep.subr.mxu0 0.0
    %1377 = vmatpush1.msra.mxu0 0.0
    %1378 = vmatprep.subr.mxu0 0.0
    %1379 = vmatpush1.msra.mxu0 0.0
    %1380 = vmatprep.subr.mxu0 0.0
    %1381 = vmatpush1.msra.mxu0 0.0
    %1382 = vmatprep.subr.mxu0 0.0
    %1383 = vmatpush1.msra.mxu0 0.0
    %1384 = vmatprep.subr.mxu0 0.0
    %1385 = vmatpush1.msra.mxu0 0.0
    %1386 = vmatprep.subr.mxu0 0.0
    %1387 = vmatpush1.msra.mxu0 0.0
    %1388 = vmatprep.subr.mxu0 0.0
    %1389 = vmatpush1.msra.mxu0 0.0
    %1390 = vmatprep.subr.mxu0 0.0
    %1391 = vmatpush1.msra.mxu0 0.0
    %1392 = vmatprep.subr.mxu0 0.0
    %1393 = vmatpush1.msra.mxu0 0.0
    %1394 = vmatprep.subr.mxu0 0.0
    %1395 = vmatpush1.msra.mxu0 0.0
    %1396 = vmatprep.subr.mxu0 0.0
    %1397 = vmatpush1.msra.mxu0 0.0
    %1398 = vmatprep.subr.mxu0 0.0
    %1399 = vmatpush1.msra.mxu0 0.0
    %1400 = vmatprep.subr.mxu0 0.0
    %1401 = vmatpush1.msra.mxu0 0.0
    %1402 = vmatprep.subr.mxu0 0.0
    %1403 = vmatpush1.msra.mxu0 0.0
    %1404 = vmatprep.subr.mxu0 0.0
    %1405 = vmatpush1.msra.mxu0 0.0
    %1406 = vmatprep.subr.mxu0 0.0
    %1407 = vmatpush1.msra.mxu0 0.0
    %1408 = vmatprep.subr.mxu0 0.0
    %1409 = vmatpush1.msra.mxu0 0.0
    %1410 = vmatprep.subr.mxu0 0.0
    %1411 = vmatpush1.msra.mxu0 0.0
    %1412 = vmatprep.subr.mxu0 0.0
    %1413 = vmatpush1.msra.mxu0 0.0
    %1414 = vmatprep.subr.mxu0 0.0
    %1415 = vmatpush1.msra.mxu0 0.0
    %1416 = vmatprep.subr.mxu0 0.0
    %1417 = vmatpush1.msra.mxu0 0.0
    %1418 = vmatprep.subr.mxu0 0.0
    %1419 = vmatpush1.msra.mxu0 0.0
    %1420 = vmatprep.subr.mxu0 0.0
    %1421 = vmatpush1.msra.mxu0 0.0
    %1422 = vmatprep.subr.mxu0 0.0
    %1423 = vmatpush1.msra.mxu0 0.0
    %1424 = vmatprep.subr.mxu0 0.0
    %1425 = vmatpush1.msra.mxu0 0.0
    %1426 = vmatprep.subr.mxu0 0.0
    %1427 = vmatpush1.msra.mxu0 0.0
    %1428 = vmatprep.subr.mxu0 0.0
    %1429 = vmatpush1.msra.mxu0 0.0
    %1430 = vmatprep.subr.mxu0 0.0
    %1431 = vmatpush1.msra.mxu0 0.0
    %1432 = vmatprep.mubr.f32.mxu0 0.0
    %1433 = vmatmul.mubr.f32.gmra.mrb[0].mxu0 %v1366
    %v1434 = vpop.f32.mrb[0].mxu0
    %v1435 = vadd.f32 0.0, %v1434
    %v1436 = vpop.f32.mrb[0].mxu0
    %1437 = vdwg.mxu0
    %1438 = vrot.lane.b32.xlu0 %v192, 40
    %v1439 = vpop.permute.xlu0 %1438
    %v1442 = vsel %vm198, %v1361, 0
    %1444 = vmatprep.subr.mxu0 0.0
    %1445 = vmatpush1.msra.mxu0 %v1439
    %1446 = vmatprep.subr.mxu0 0.0
    %1447 = vmatpush1.msra.mxu0 0.0
    %1448 = vmatprep.subr.mxu0 0.0
    %1449 = vmatpush1.msra.mxu0 0.0
    %1450 = vmatprep.subr.mxu0 0.0
    %1451 = vmatpush1.msra.mxu0 0.0
    %1452 = vmatprep.subr.mxu0 0.0
    %1453 = vmatpush1.msra.mxu0 0.0
    %1454 = vmatprep.subr.mxu0 0.0
    %1455 = vmatpush1.msra.mxu0 0.0
    %1456 = vmatprep.subr.mxu0 0.0
    %1457 = vmatpush1.msra.mxu0 0.0
    %1458 = vmatprep.subr.mxu0 0.0
    %1459 = vmatpush1.msra.mxu0 0.0
    %1460 = vmatprep.subr.mxu0 0.0
    %1461 = vmatpush1.msra.mxu0 0.0
    %1462 = vmatprep.subr.mxu0 0.0
    %1463 = vmatpush1.msra.mxu0 0.0
    %1464 = vmatprep.subr.mxu0 0.0
    %1465 = vmatpush1.msra.mxu0 0.0
    %1466 = vmatprep.subr.mxu0 0.0
    %1467 = vmatpush1.msra.mxu0 0.0
    %1468 = vmatprep.subr.mxu0 0.0
    %1469 = vmatpush1.msra.mxu0 0.0
    %1470 = vmatprep.subr.mxu0 0.0
    %1471 = vmatpush1.msra.mxu0 0.0
    %1472 = vmatprep.subr.mxu0 0.0
    %1473 = vmatpush1.msra.mxu0 0.0
    %1474 = vmatprep.subr.mxu0 0.0
    %1475 = vmatpush1.msra.mxu0 0.0
    %1476 = vmatprep.subr.mxu0 0.0
    %1477 = vmatpush1.msra.mxu0 0.0
    %1478 = vmatprep.subr.mxu0 0.0
    %1479 = vmatpush1.msra.mxu0 0.0
    %1480 = vmatprep.subr.mxu0 0.0
    %1481 = vmatpush1.msra.mxu0 0.0
    %1482 = vmatprep.subr.mxu0 0.0
    %1483 = vmatpush1.msra.mxu0 0.0
    %1484 = vmatprep.subr.mxu0 0.0
    %1485 = vmatpush1.msra.mxu0 0.0
    %1486 = vmatprep.subr.mxu0 0.0
    %1487 = vmatpush1.msra.mxu0 0.0
    %1488 = vmatprep.subr.mxu0 0.0
    %1489 = vmatpush1.msra.mxu0 0.0
    %1490 = vmatprep.subr.mxu0 0.0
    %1491 = vmatpush1.msra.mxu0 0.0
    %1492 = vmatprep.subr.mxu0 0.0
    %1493 = vmatpush1.msra.mxu0 0.0
    %1494 = vmatprep.subr.mxu0 0.0
    %1495 = vmatpush1.msra.mxu0 0.0
    %1496 = vmatprep.subr.mxu0 0.0
    %1497 = vmatpush1.msra.mxu0 0.0
    %1498 = vmatprep.subr.mxu0 0.0
    %1499 = vmatpush1.msra.mxu0 0.0
    %1500 = vmatprep.subr.mxu0 0.0
    %1501 = vmatpush1.msra.mxu0 0.0
    %1502 = vmatprep.subr.mxu0 0.0
    %1503 = vmatpush1.msra.mxu0 0.0
    %1504 = vmatprep.subr.mxu0 0.0
    %1505 = vmatpush1.msra.mxu0 0.0
    %1506 = vmatprep.subr.mxu0 0.0
    %1507 = vmatpush1.msra.mxu0 0.0
    %1508 = vmatprep.mubr.f32.mxu0 0.0
    %1509 = vmatmul.mubr.f32.gmra.mrb[0].mxu0 %v1442
    %v1510 = vpop.f32.mrb[0].mxu0
    %v1511 = vadd.f32 0.0, %v1510
    %v1512 = vpop.f32.mrb[0].mxu0
    %1513 = vdwg.mxu0
    %1516 = vrot.lane.b32.xlu0 %v775, 8
    %v1517 = vpop.permute.xlu0 %1516
    %1518 = vrot.lane.b32.xlu0 %v851, 8
    %v1519 = vpop.permute.xlu0 %1518
    %1524 = vrot.lane.b32.xlu0 %v1105, 16
    %v1525 = vpop.permute.xlu0 %1524
    %1526 = vrot.lane.b32.xlu0 %v1181, 16
    %v1527 = vpop.permute.xlu0 %1526
    %1532 = vrot.lane.b32.xlu0 %v1435, 24
    %v1533 = vpop.permute.xlu0 %1532
    %1534 = vrot.lane.b32.xlu0 %v1511, 24
    %v1535 = vpop.permute.xlu0 %1534
    %v1538 = vsel %vm198, %v445, %v1517
    %v1539 = vsel %vm198, %v521, %v1519
    %vm1540 = vcmask 130048
    %v1541 = vsel %vm1540, %v1538, %v1525
    %v1542 = vsel %vm1540, %v1539, %v1527
    %vm1543 = vcmask 195584
    %v1544 = vsel %vm1543, %v1541, %v1533
    %v1545 = vsel %vm1543, %v1542, %v1535
    %v1546 = vlaneseq
    %v1547 = vshrl.u32 %v1546, 7
    %v1548 = vsub.s32 0, %v1547
    %v1549 = vrot.slane %v47, %v1548
    %v1551 = vsel %vm70, %v1544, 0
    %v1554 = vsel %vm70, %v1545, 0
    %1556 = vmatprep.subr.mxu0 0.0
    %1557 = vmatpush1.msra.mxu0 %v54
    %1558 = vmatprep.subr.mxu0 0.0
    %1559 = vmatpush1.msra.mxu0 %v55
    %1560 = vmatprep.subr.mxu0 0.0
    %1561 = vmatpush1.msra.mxu0 %v56
    %1562 = vmatprep.subr.mxu0 0.0
    %1563 = vmatpush1.msra.mxu0 %v57
    %1564 = vmatprep.subr.mxu0 0.0
    %1565 = vmatpush1.msra.mxu0 0.0
    %1566 = vmatprep.subr.mxu0 0.0
    %1567 = vmatpush1.msra.mxu0 0.0
    %1568 = vmatprep.subr.mxu0 0.0
    %1569 = vmatpush1.msra.mxu0 0.0
    %1570 = vmatprep.subr.mxu0 0.0
    %1571 = vmatpush1.msra.mxu0 0.0
    %1572 = vmatprep.subr.mxu0 0.0
    %1573 = vmatpush1.msra.mxu0 0.0
    %1574 = vmatprep.subr.mxu0 0.0
    %1575 = vmatpush1.msra.mxu0 0.0
    %1576 = vmatprep.subr.mxu0 0.0
    %1577 = vmatpush1.msra.mxu0 0.0
    %1578 = vmatprep.subr.mxu0 0.0
    %1579 = vmatpush1.msra.mxu0 0.0
    %1580 = vmatprep.subr.mxu0 0.0
    %1581 = vmatpush1.msra.mxu0 0.0
    %1582 = vmatprep.subr.mxu0 0.0
    %1583 = vmatpush1.msra.mxu0 0.0
    %1584 = vmatprep.subr.mxu0 0.0
    %1585 = vmatpush1.msra.mxu0 0.0
    %1586 = vmatprep.subr.mxu0 0.0
    %1587 = vmatpush1.msra.mxu0 0.0
    %1588 = vmatprep.subr.mxu0 0.0
    %1589 = vmatpush1.msra.mxu0 0.0
    %1590 = vmatprep.subr.mxu0 0.0
    %1591 = vmatpush1.msra.mxu0 0.0
    %1592 = vmatprep.subr.mxu0 0.0
    %1593 = vmatpush1.msra.mxu0 0.0
    %1594 = vmatprep.subr.mxu0 0.0
    %1595 = vmatpush1.msra.mxu0 0.0
    %1596 = vmatprep.subr.mxu0 0.0
    %1597 = vmatpush1.msra.mxu0 0.0
    %1598 = vmatprep.subr.mxu0 0.0
    %1599 = vmatpush1.msra.mxu0 0.0
    %1600 = vmatprep.subr.mxu0 0.0
    %1601 = vmatpush1.msra.mxu0 0.0
    %1602 = vmatprep.subr.mxu0 0.0
    %1603 = vmatpush1.msra.mxu0 0.0
    %1604 = vmatprep.subr.mxu0 0.0
    %1605 = vmatpush1.msra.mxu0 0.0
    %1606 = vmatprep.subr.mxu0 0.0
    %1607 = vmatpush1.msra.mxu0 0.0
    %1608 = vmatprep.subr.mxu0 0.0
    %1609 = vmatpush1.msra.mxu0 0.0
    %1610 = vmatprep.subr.mxu0 0.0
    %1611 = vmatpush1.msra.mxu0 0.0
    %1612 = vmatprep.subr.mxu0 0.0
    %1613 = vmatpush1.msra.mxu0 0.0
    %1614 = vmatprep.subr.mxu0 0.0
    %1615 = vmatpush1.msra.mxu0 0.0
    %1616 = vmatprep.subr.mxu0 0.0
    %1617 = vmatpush1.msra.mxu0 0.0
    %1618 = vmatprep.subr.mxu0 0.0
    %1619 = vmatpush1.msra.mxu0 0.0
    %1620 = vmatprep.mubr.f32.mxu0 0.0
    %1621 = vmatmul.mubr.f32.gmra.mrb[0].mxu0 %v1551
    %v1622 = vpop.f32.mrb[0].mxu0
    %v1623 = vadd.f32 %v1549, %v1622
    %v1624 = vpop.f32.mrb[0].mxu0
    %1625 = vmatprep.mubr.f32.mxu0 0.0
    %1626 = vmatmul.mubr.f32.gmra.mrb[0].mxu0 %v1554
    %v1627 = vpop.f32.mrb[0].mxu0
    %v1628 = vadd.f32 %v1549, %v1627
    %v1629 = vpop.f32.mrb[0].mxu0
    %1630 = vdwg.mxu0
    %v1631 = vadd.f32 %v40, %v1623
    %v1632 = vadd.f32 %v41, %v1628
    %v1633 = vsel %vm70, %v1631, 0.0
    %1634 = vadd.xlane.f32.xlu0 %v1633
    %v1635 = vpop.xlane.xlu0 %1634
    %v1636 = vsel %vm70, %v1632, 0.0
    %1637 = vadd.xlane.f32.xlu0 %v1636
    %v1638 = vpop.xlane.xlu0 %1637
    %v1639 = vmul.f32 %v1635, %v77
    %v1640 = vmul.f32 %v1638, %v77
    %v1641 = vsub.f32 %v1631, %v1639
    %v1642 = vsub.f32 %v1632, %v1640
    %v1643 = vmul.f32 %v1641, %v1641
    %v1644 = vmul.f32 %v1642, %v1642
    %v1645 = vsel %vm70, %v1643, 0.0
    %1646 = vadd.xlane.f32.xlu0 %v1645
    %v1647 = vpop.xlane.xlu0 %1646
    %v1648 = vsel %vm70, %v1644, 0.0
    %1649 = vadd.xlane.f32.xlu0 %v1648
    %v1650 = vpop.xlane.xlu0 %1649
    %v1651 = vmul.f32 %v1647, %v77
    %v1652 = vmul.f32 %v1650, %v77
    %v1653 = vadd.f32 %v1651, 1e-06
    %v1654 = vadd.f32 %v1652, 1e-06
    %v1655 = vrsqrt.pop %v1653
    %v1656 = vrsqrt.pop %v1654
    %v1657 = vmul.f32 %v1641, %v1655
    %v1658 = vmul.f32 %v1642, %v1656
    %v1659 = vlaneseq
    %v1660 = vshrl.u32 %v1659, 7
    %v1661 = vsub.s32 0, %v1660
    %v1662 = vrot.slane %v44, %v1661
    %v1663 = vmul.f32 %v1657, %v1662
    %v1664 = vmul.f32 %v1658, %v1662
    %v1665 = vlaneseq
    %v1666 = vshrl.u32 %v1665, 7
    %v1667 = vsub.s32 0, %v1666
    %v1668 = vrot.slane %v45, %v1667
    %v1669 = vadd.f32 %v1663, %v1668
    %v1670 = vadd.f32 %v1664, %v1668
    %v1671 = vlaneseq
    %v1672 = vshrl.u32 %v1671, 7
    %v1673 = vsub.s32 0, %v1672
    %v1674 = vrot.slane %v48, %v1673
    %v1676 = vsel %vm70, %v1669, 0
    %v1679 = vsel %vm70, %v1670, 0
    %1681 = vmatprep.subr.mxu0 0.0
    %1682 = vmatpush1.msra.mxu0 %v58
    %1683 = vmatprep.subr.mxu0 0.0
    %1684 = vmatpush1.msra.mxu0 %v59
    %1685 = vmatprep.subr.mxu0 0.0
    %1686 = vmatpush1.msra.mxu0 %v60
    %1687 = vmatprep.subr.mxu0 0.0
    %1688 = vmatpush1.msra.mxu0 %v61
    %1689 = vmatprep.subr.mxu0 0.0
    %1690 = vmatpush1.msra.mxu0 0.0
    %1691 = vmatprep.subr.mxu0 0.0
    %1692 = vmatpush1.msra.mxu0 0.0
    %1693 = vmatprep.subr.mxu0 0.0
    %1694 = vmatpush1.msra.mxu0 0.0
    %1695 = vmatprep.subr.mxu0 0.0
    %1696 = vmatpush1.msra.mxu0 0.0
    %1697 = vmatprep.subr.mxu0 0.0
    %1698 = vmatpush1.msra.mxu0 0.0
    %1699 = vmatprep.subr.mxu0 0.0
    %1700 = vmatpush1.msra.mxu0 0.0
    %1701 = vmatprep.subr.mxu0 0.0
    %1702 = vmatpush1.msra.mxu0 0.0
    %1703 = vmatprep.subr.mxu0 0.0
    %1704 = vmatpush1.msra.mxu0 0.0
    %1705 = vmatprep.subr.mxu0 0.0
    %1706 = vmatpush1.msra.mxu0 0.0
    %1707 = vmatprep.subr.mxu0 0.0
    %1708 = vmatpush1.msra.mxu0 0.0
    %1709 = vmatprep.subr.mxu0 0.0
    %1710 = vmatpush1.msra.mxu0 0.0
    %1711 = vmatprep.subr.mxu0 0.0
    %1712 = vmatpush1.msra.mxu0 0.0
    %1713 = vmatprep.subr.mxu0 0.0
    %1714 = vmatpush1.msra.mxu0 0.0
    %1715 = vmatprep.subr.mxu0 0.0
    %1716 = vmatpush1.msra.mxu0 0.0
    %1717 = vmatprep.subr.mxu0 0.0
    %1718 = vmatpush1.msra.mxu0 0.0
    %1719 = vmatprep.subr.mxu0 0.0
    %1720 = vmatpush1.msra.mxu0 0.0
    %1721 = vmatprep.subr.mxu0 0.0
    %1722 = vmatpush1.msra.mxu0 0.0
    %1723 = vmatprep.subr.mxu0 0.0
    %1724 = vmatpush1.msra.mxu0 0.0
    %1725 = vmatprep.subr.mxu0 0.0
    %1726 = vmatpush1.msra.mxu0 0.0
    %1727 = vmatprep.subr.mxu0 0.0
    %1728 = vmatpush1.msra.mxu0 0.0
    %1729 = vmatprep.subr.mxu0 0.0
    %1730 = vmatpush1.msra.mxu0 0.0
    %1731 = vmatprep.subr.mxu0 0.0
    %1732 = vmatpush1.msra.mxu0 0.0
    %1733 = vmatprep.subr.mxu0 0.0
    %1734 = vmatpush1.msra.mxu0 0.0
    %1735 = vmatprep.subr.mxu0 0.0
    %1736 = vmatpush1.msra.mxu0 0.0
    %1737 = vmatprep.subr.mxu0 0.0
    %1738 = vmatpush1.msra.mxu0 0.0
    %1739 = vmatprep.subr.mxu0 0.0
    %1740 = vmatpush1.msra.mxu0 0.0
    %1741 = vmatprep.subr.mxu0 0.0
    %1742 = vmatpush1.msra.mxu0 0.0
    %1743 = vmatprep.subr.mxu0 0.0
    %1744 = vmatpush1.msra.mxu0 0.0
    %1745 = vmatprep.mubr.f32.mxu0 0.0
    %1746 = vmatmul.mubr.f32.gmra.mrb[0].mxu0 %v1676
    %v1747 = vpop.f32.mrb[0].mxu0
    %v1748 = vadd.f32 %v1674, %v1747
    %v1749 = vpop.f32.mrb[0].mxu0
    %1750 = vmatprep.mubr.f32.mxu0 0.0
    %1751 = vmatmul.mubr.f32.gmra.mrb[0].mxu0 %v1679
    %v1752 = vpop.f32.mrb[0].mxu0
    %v1753 = vadd.f32 %v1674, %v1752
    %v1754 = vpop.f32.mrb[0].mxu0
    %1755 = vdwg.mxu0
    %v1756 = vmul.f32 %v1748, 0.5
    %v1757 = vmul.f32 %v1753, 0.5
    %v1758 = vmul.f32 %v1748, 0.70710677
    %v1759 = vmul.f32 %v1753, 0.70710677
    %v1760 = verf.f32.pop %v1758
    %v1761 = verf.f32.pop %v1759
    %v1762 = vadd.f32 %v1760, 1.0
    %v1763 = vadd.f32 %v1761, 1.0
    %v1764 = vmul.f32 %v1756, %v1762
    %v1765 = vmul.f32 %v1757, %v1763
    %v1766 = vlaneseq
    %v1767 = vshrl.u32 %v1766, 7
    %v1768 = vsub.s32 0, %v1767
    %v1769 = vrot.slane %v49, %v1768
    %vm1770 = vcmask 523264
    %v1772 = vsel %vm1770, %v1764, 0
    %v1775 = vsel %vm1770, %v1765, 0
    %1777 = vmatprep.subr.mxu0 0.0
    %1778 = vmatpush1.msra.mxu0 %v62
    %1779 = vmatprep.subr.mxu0 0.0
    %1780 = vmatpush1.msra.mxu0 %v63
    %1781 = vmatprep.subr.mxu0 0.0
    %1782 = vmatpush1.msra.mxu0 %v64
    %1783 = vmatprep.subr.mxu0 0.0
    %1784 = vmatpush1.msra.mxu0 %v65
    %1785 = vmatprep.subr.mxu0 0.0
    %1786 = vmatpush1.msra.mxu0 %v66
    %1787 = vmatprep.subr.mxu0 0.0
    %1788 = vmatpush1.msra.mxu0 %v67
    %1789 = vmatprep.subr.mxu0 0.0
    %1790 = vmatpush1.msra.mxu0 %v68
    %1791 = vmatprep.subr.mxu0 0.0
    %1792 = vmatpush1.msra.mxu0 %v69
    %1793 = vmatprep.subr.mxu0 0.0
    %1794 = vmatpush1.msra.mxu0 0.0
    %1795 = vmatprep.subr.mxu0 0.0
    %1796 = vmatpush1.msra.mxu0 0.0
    %1797 = vmatprep.subr.mxu0 0.0
    %1798 = vmatpush1.msra.mxu0 0.0
    %1799 = vmatprep.subr.mxu0 0.0
    %1800 = vmatpush1.msra.mxu0 0.0
    %1801 = vmatprep.subr.mxu0 0.0
    %1802 = vmatpush1.msra.mxu0 0.0
    %1803 = vmatprep.subr.mxu0 0.0
    %1804 = vmatpush1.msra.mxu0 0.0
    %1805 = vmatprep.subr.mxu0 0.0
    %1806 = vmatpush1.msra.mxu0 0.0
    %1807 = vmatprep.subr.mxu0 0.0
    %1808 = vmatpush1.msra.mxu0 0.0
    %1809 = vmatprep.subr.mxu0 0.0
    %1810 = vmatpush1.msra.mxu0 0.0
    %1811 = vmatprep.subr.mxu0 0.0
    %1812 = vmatpush1.msra.mxu0 0.0
    %1813 = vmatprep.subr.mxu0 0.0
    %1814 = vmatpush1.msra.mxu0 0.0
    %1815 = vmatprep.subr.mxu0 0.0
    %1816 = vmatpush1.msra.mxu0 0.0
    %1817 = vmatprep.subr.mxu0 0.0
    %1818 = vmatpush1.msra.mxu0 0.0
    %1819 = vmatprep.subr.mxu0 0.0
    %1820 = vmatpush1.msra.mxu0 0.0
    %1821 = vmatprep.subr.mxu0 0.0
    %1822 = vmatpush1.msra.mxu0 0.0
    %1823 = vmatprep.subr.mxu0 0.0
    %1824 = vmatpush1.msra.mxu0 0.0
    %1825 = vmatprep.subr.mxu0 0.0
    %1826 = vmatpush1.msra.mxu0 0.0
    %1827 = vmatprep.subr.mxu0 0.0
    %1828 = vmatpush1.msra.mxu0 0.0
    %1829 = vmatprep.subr.mxu0 0.0
    %1830 = vmatpush1.msra.mxu0 0.0
    %1831 = vmatprep.subr.mxu0 0.0
    %1832 = vmatpush1.msra.mxu0 0.0
    %1833 = vmatprep.subr.mxu0 0.0
    %1834 = vmatpush1.msra.mxu0 0.0
    %1835 = vmatprep.subr.mxu0 0.0
    %1836 = vmatpush1.msra.mxu0 0.0
    %1837 = vmatprep.subr.mxu0 0.0
    %1838 = vmatpush1.msra.mxu0 0.0
    %1839 = vmatprep.subr.mxu0 0.0
    %1840 = vmatpush1.msra.mxu0 0.0
    %1841 = vmatprep.mubr.f32.mxu0 0.0
    %1842 = vmatmul.mubr.f32.gmra.mrb[0].mxu0 %v1772
    %v1843 = vpop.f32.mrb[0].mxu0
    %v1844 = vadd.f32 %v1769, %v1843
    %v1845 = vpop.f32.mrb[0].mxu0
    %1846 = vmatprep.mubr.f32.mxu0 0.0
    %1847 = vmatmul.mubr.f32.gmra.mrb[0].mxu0 %v1775
    %v1848 = vpop.f32.mrb[0].mxu0
    %v1849 = vadd.f32 %v1769, %v1848
    %v1850 = vpop.f32.mrb[0].mxu0
    %1851 = vdwg.mxu0
    %v1852 = vadd.f32 %v1631, %v1844
    %v1853 = vadd.f32 %v1632, %v1849
    %1854 = vst.msk [vmem:[#allocation7] sm:$0xff] %vm70, %v1852
    %1855 = vst.msk [vmem:[#allocation7 + $0x8] sm:$0xff] %vm70, %v1853
    // Predicated region
    $region18: #{tpu_custom_call.1} parent=1 // pred_check
      _
    $region19: #{tpu_custom_call.1} parent=1 // pred_check_branch
      %1857 = sbr.rel (0) target = $region21
    $region20: #{tpu_custom_call.1} parent=1 // pred_region
      %s1859 = ssub.s32 256, 256
      %1860 = vsyncadd [#allocation4], %s1859
      %s1861 = sshll.u32 [#allocation7], 4
      %s1862 = int_to_ptr.vmem [resolvable:$true] %s1861
      %1867 = dma.vmem_to_hbm [thread:$0]  %s1862, 256, %s2, [#allocation4], 128, 128, 8
    $region21: #{tpu_custom_call.1} parent=1 // pred_fallthru
      _
    // Predicated region
    $region22: #{tpu_custom_call.1} parent=1 // pred_check
      _
    $region23: #{tpu_custom_call.1} parent=1 // pred_check_branch
      %1869 = sbr.rel (0) target = $region25
    $region24: #{tpu_custom_call.1} parent=1 // pred_region
      %1870 = dma.done [#allocation4], 256
    $region25: #{tpu_custom_call.1} parent=1 // pred_fallthru
      _
    %1871 = vsyncpa [#allocation3], 1
    %1872 = vsyncpa [#allocation6], 1
    %1873 = vsyncpa [#allocation4], 1

</llo_original>
